<compile_context>
chip_gen: v7x
topology: tpu7x:2x2x1
jax: 0.10.0
libtpu: 0.0.40
codegen_flags: <defaults>
</compile_context>

<pallas_src>
import functools
import numpy as np
import jax
import jax.numpy as jnp
from jax.experimental import pallas as pl
from jax.experimental.pallas import tpu as pltpu  # noqa: F401  (used when tiling at real size)

# ----------------------------- sizes -----------------------------------------
B = 2              # batch
V = 512            # vertices (real SMPL: 6890 -> pad to 6912) -- synthetic mesh
NJ = 24            # SMPL joints
NJ54 = 54          # SMPL_ALL_54 regressed joints
JPAD = 128         # lane-padded joint-regression width (54 -> 128, lane dense)
NBETA = 10
CAM_DIM, ROT_DIM = 3, 6                                       # args().cam_dim / rot_dim
PARAMS_NUM = CAM_DIM + ROT_DIM + (NJ - 1) * ROT_DIM + NBETA   # 157
NPOSEFEAT = (NJ - 1) * 9                                      # 207
PF_PAD = 256                                                  # pose-feature K lane-padded
SUBLANE = 8                                                   # batch padded to 8 sublanes

PARENTS = np.array([-1, 0, 0, 0, 1, 2, 3, 4, 5, 6, 7, 8, 9, 9, 9,
                    12, 13, 14, 16, 17, 18, 19, 20, 21], dtype=np.int32)


def _tree_levels(parents):
    depth = np.zeros(len(parents), np.int32)
    for j in range(1, len(parents)):
        depth[j] = depth[parents[j]] + 1
    return [np.nonzero(depth == d)[0] for d in range(int(depth.max()) + 1)]


LEVELS = _tree_levels(PARENTS)   # 9 depth levels -> 8 batched matmuls in the chain


# ----------------------------- fused Pallas kernel ----------------------------
def _smpl_lbs_kernel(betas_ref, pf_ref, cam_ref, a_ref,
                     vt_ref, sd_ref, pd_ref, lbswT_ref, jreg54T_ref,
                     vout_ref, vcam_ref, j3_ref, pj_ref):
    """Fused SMPL blendshapes + linear blend skinning + weak-persp projection.

    Per-vertex data is lane-stacked [BP, 3V] (x|y|z blocks along the 128-wide
    lane axis); batch is padded to BP=8 so every vreg op fills the sublane axis
    and every slice below is 8-sublane / 128-lane aligned (unmasked, no XLU
    repacking). Single grid-less call: whole problem resident in VMEM, so no
    accumulator / pl.when logic.
    """
    f32 = jnp.float32
    BP = cam_ref.shape[0]
    Vn = lbswT_ref.shape[1]

    # --- shape + pose blendshapes: two wide lane-dense MXU dots (bf16 in, f32 acc)
    v_shaped = vt_ref[...] + jnp.dot(betas_ref[...], sd_ref[...],
                                     preferred_element_type=f32)             # [BP, 3V]
    v_posed = v_shaped + jnp.dot(pf_ref[...], pd_ref[...],
                                 preferred_element_type=f32)                 # [BP, 3V]

    # --- LBS: all 12 per-vertex transform components in ONE MXU matmul.
    #     Kept f32 (translation accuracy); T[c*BP + b, v] = sum_j A[c,b,j] w[v,j]
    T = jnp.dot(a_ref[...], lbswT_ref[...], preferred_element_type=f32)      # [12BP, V]

    px = v_posed[:, 0:Vn]
    py = v_posed[:, Vn:2 * Vn]
    pz = v_posed[:, 2 * Vn:3 * Vn]

    def t(c):                            # static, 8-sublane-aligned slice of comp c
        return T[c * BP:(c + 1) * BP, :]

    vx = t(0) * px + t(1) * py + t(2) * pz + t(9)
    vy = t(3) * px + t(4) * py + t(5) * pz + t(10)
    vz = t(6) * px + t(7) * py + t(8) * pz + t(11)

    # --- direct lane-aligned slice stores (no concatenates / VMEM copies)
    vout_ref[:, 0:Vn] = vx
    vout_ref[:, Vn:2 * Vn] = vy
    vout_ref[:, 2 * Vn:3 * Vn] = vz

    # --- weak-perspective projection of the vertices (batch_orth_proj):
    #     xy * scale + trans, z passed through
    cam = cam_ref[...]
    s, tx, ty = cam[:, 0:1], cam[:, 1:2], cam[:, 2:3]
    vcam_ref[:, 0:Vn] = vx * s + tx
    vcam_ref[:, Vn:2 * Vn] = vy * s + ty
    vcam_ref[:, 2 * Vn:3 * Vn] = vz

    # --- 54-joint regression (f32): three [BP,V]@[V,128] dots straight into
    #     8-sublane-aligned row slices of the lane-padded output.
    jr = jreg54T_ref[...]
    jx = jnp.dot(vx, jr, preferred_element_type=f32)                         # [BP, 128]
    jy = jnp.dot(vy, jr, preferred_element_type=f32)
    jz = jnp.dot(vz, jr, preferred_element_type=f32)
    j3_ref[0:BP, :] = jx
    j3_ref[BP:2 * BP, :] = jy
    j3_ref[2 * BP:3 * BP, :] = jz

    # --- pj2d (keypoint projection) folded into the epilogue: free VPU work.
    pj_ref[0:BP, :] = jx * s + tx
    pj_ref[BP:2 * BP, :] = jy * s + ty


def smpl_lbs_pallas(betas, pf, cam, A2, m):
    BP = cam.shape[0]
    out_shape = (jax.ShapeDtypeStruct((BP, 3 * V), jnp.float32),     # verts (planar)
                 jax.ShapeDtypeStruct((BP, 3 * V), jnp.float32),     # verts_camed
                 jax.ShapeDtypeStruct((3 * BP, JPAD), jnp.float32),  # j3d (planar, padded)
                 jax.ShapeDtypeStruct((2 * BP, JPAD), jnp.float32))  # pj2d (planar, padded)
    # No grid / BlockSpecs: every operand is placed whole in VMEM (< 1.5 MiB here),
    # and no vmem_limit is reserved at this size.
    # TODO(synk): at real SMPL size (V=6890, pad to 6912) add a vertex-tiled grid
    # with dimension_semantics=("parallel",) sized so double-buffered posedirs
    # tiles fit the 32 MiB scoped-VMEM default (mandatory on v7x: 2 TensorCores,
    # 64 MiB physical VMEM), and raise the caller batch to amortize weight reads.
    return pl.pallas_call(
        _smpl_lbs_kernel,
        out_shape=out_shape,
    )(betas, pf, cam, A2, m['vt'], m['sd'], m['pd'], m['lbswT'], m['jreg54T'])


def smpl_lbs_reference(betas, pf, cam, A2, m):
    """Pure-JAX reference of the exact same math/layout (validation only)."""
    f32 = jnp.float32
    BP = cam.shape[0]
    v_shaped = m['vt'] + jnp.dot(betas, m['sd'], preferred_element_type=f32)
    v_posed = v_shaped + jnp.dot(pf, m['pd'], preferred_element_type=f32)
    T = jnp.dot(A2, m['lbswT'], preferred_element_type=f32)
    px, py, pz = v_posed[:, :V], v_posed[:, V:2 * V], v_posed[:, 2 * V:]
    t = lambda c: T[c * BP:(c + 1) * BP, :]
    vx = t(0) * px + t(1) * py + t(2) * pz + t(9)
    vy = t(3) * px + t(4) * py + t(5) * pz + t(10)
    vz = t(6) * px + t(7) * py + t(8) * pz + t(11)
    v_out = jnp.concatenate([vx, vy, vz], axis=1)
    s, tx, ty = cam[:, 0:1], cam[:, 1:2], cam[:, 2:3]
    v_cam = jnp.concatenate([vx * s + tx, vy * s + ty, vz], axis=1)
    jr = m['jreg54T']
    jx = jnp.dot(vx, jr, preferred_element_type=f32)
    jy = jnp.dot(vy, jr, preferred_element_type=f32)
    jz = jnp.dot(vz, jr, preferred_element_type=f32)
    j3 = jnp.concatenate([jx, jy, jz], axis=0)
    pj = jnp.concatenate([jx * s + tx, jy * s + ty], axis=0)
    return v_out, v_cam, j3, pj


# ----------------------------- plain-JAX glue ---------------------------------
def rot6d_to_rotmat(x):
    """[N, 6] -> [N, 3, 3] (Gram-Schmidt on the two 3-D columns)."""
    x = x.reshape(-1, 3, 2)
    a1, a2 = x[..., 0], x[..., 1]
    b1 = a1 / jnp.maximum(jnp.linalg.norm(a1, axis=-1, keepdims=True), 1e-8)
    d = jnp.sum(b1 * a2, axis=-1, keepdims=True)
    b2u = a2 - d * b1
    b2 = b2u / jnp.maximum(jnp.linalg.norm(b2u, axis=-1, keepdims=True), 1e-8)
    b3 = jnp.cross(b1, b2)
    return jnp.stack([b1, b2, b3], axis=-1)


def rotmat_to_axis_angle(R):
    """[N,3,3] -> [N,3] axis-angle via quaternion (mirrors ROMP's
    rotation_matrix_to_angle_axis path; well-conditioned near angle ~ 0 and ~ pi)."""
    m00, m01, m02 = R[..., 0, 0], R[..., 0, 1], R[..., 0, 2]
    m10, m11, m12 = R[..., 1, 0], R[..., 1, 1], R[..., 1, 2]
    m20, m21, m22 = R[..., 2, 0], R[..., 2, 1], R[..., 2, 2]
    trace = m00 + m11 + m22
    ssqrt = lambda v: jnp.sqrt(jnp.maximum(v, 1e-12))

    s0 = ssqrt(trace + 1.0) * 2.0
    q0 = jnp.stack([0.25 * s0, (m21 - m12) / s0, (m02 - m20) / s0, (m10 - m01) / s0], -1)
    s1 = ssqrt(1.0 + m00 - m11 - m22) * 2.0
    q1 = jnp.stack([(m21 - m12) / s1, 0.25 * s1, (m01 + m10) / s1, (m02 + m20) / s1], -1)
    s2 = ssqrt(1.0 + m11 - m00 - m22) * 2.0
    q2 = jnp.stack([(m02 - m20) / s2, (m01 + m10) / s2, 0.25 * s2, (m12 + m21) / s2], -1)
    s3 = ssqrt(1.0 + m22 - m00 - m11) * 2.0
    q3 = jnp.stack([(m10 - m01) / s3, (m02 + m20) / s3, (m12 + m21) / s3, 0.25 * s3], -1)

    cond0 = (trace > 0.0)[..., None]
    cond1 = ((m00 > m11) & (m00 > m22))[..., None]
    cond2 = (m11 > m22)[..., None]
    q = jnp.where(cond0, q0, jnp.where(cond1, q1, jnp.where(cond2, q2, q3)))  # (w,x,y,z)

    w, x, y, z = q[..., 0], q[..., 1], q[..., 2], q[..., 3]
    sin_sq = x * x + y * y + z * z
    sin_t = jnp.sqrt(jnp.maximum(sin_sq, 0.0))
    two_theta = 2.0 * jnp.where(w < 0.0, jnp.arctan2(-sin_t, -w), jnp.arctan2(sin_t, w))
    k = jnp.where(sin_sq > 1e-12, two_theta / jnp.maximum(sin_t, 1e-12), 2.0)
    return jnp.stack([x * k, y * k, z * k], axis=-1)


def batch_rigid_transform(rot_mats, joints):
    """Kinematic chain batched by tree depth: 8 batched 4x4 matmul levels instead
    of 23 sequential tiny matmuls. Returns A12 [B,24,12] (rot row-major 9 + trans 3)
    and posed joints [B,24,3] (joints_smpl24)."""
    Bn = joints.shape[0]
    rel_joints = joints.at[:, 1:].add(-joints[:, PARENTS[1:]])

    top = jnp.concatenate([rot_mats, rel_joints[..., None]], axis=-1)          # [B,24,3,4]
    bot = jnp.broadcast_to(jnp.array([0., 0., 0., 1.], rot_mats.dtype), (Bn, NJ, 1, 4))
    T_local = jnp.concatenate([top, bot], axis=2)                              # [B,24,4,4]

    world = jnp.zeros_like(T_local)
    world = world.at[:, LEVELS[0]].set(T_local[:, LEVELS[0]])
    for idx in LEVELS[1:]:                                                     # 8 levels
        par = PARENTS[idx]
        world = world.at[:, idx].set(
            jnp.einsum('bjmn,bjnk->bjmk', world[:, par], T_local[:, idx]))
    posed_joints = world[:, :, :3, 3]                                          # [B,24,3]
    Rg = world[:, :, :3, :3]
    rel_t = posed_joints - jnp.einsum('bjmn,bjn->bjm', Rg, joints)             # t - R @ j_rest
    A12 = jnp.concatenate([Rg.reshape(Bn, NJ, 9), rel_t], axis=-1)             # [B,24,12]
    return A12, posed_joints


def init_model(key):
    """Deterministic synthetic SMPL tensors, pre-laid-out for the kernel."""
    ks = jax.random.split(key, 6)
    vt3 = jax.random.normal(ks[0], (3, V), jnp.float32) * 0.1               # v_template
    sd3 = jax.random.normal(ks[1], (3, NBETA, V), jnp.float32) * 0.01       # shapedirs
    pd3 = jax.random.normal(ks[2], (3, NPOSEFEAT, V), jnp.float32) * 0.001  # posedirs
    jreg = jax.nn.softmax(jax.random.normal(ks[3], (NJ, V), jnp.float32), axis=-1)
    jreg54 = jax.nn.softmax(jax.random.normal(ks[4], (NJ54, V), jnp.float32), axis=-1)
    lbsw = jax.nn.softmax(jax.random.normal(ks[5], (V, NJ), jnp.float32) * 2.0, axis=-1)

    # lane-stacked layouts (coordinate blocks x|y|z along the last / lane dim)
    vt = vt3.reshape(1, 3 * V)                                                      # f32
    sd = jnp.transpose(sd3, (1, 0, 2)).reshape(NBETA, 3 * V).astype(jnp.bfloat16)
    pd207 = jnp.transpose(pd3, (1, 0, 2)).reshape(NPOSEFEAT, 3 * V)
    pd = (jnp.zeros((PF_PAD, 3 * V), jnp.float32)
          .at[:NPOSEFEAT].set(pd207)).astype(jnp.bfloat16)                          # [256,3V]
    lbswT = jnp.transpose(lbsw)                                                     # [24,V] f32
    jreg54T = (jnp.zeros((V, JPAD), jnp.float32)
               .at[:, :NJ54].set(jnp.transpose(jreg54)))                            # [V,128] f32

    # exact linear factorization of the rest-pose joint regression:
    #   J = jreg @ (v_template + shapedirs . betas) = J_template + J_shapedirs . betas
    J_template = jnp.einsum('jv,cv->jc', jreg, vt3)                                 # [24, 3]
    J_shapedirs = jnp.einsum('jv,clv->ljc', jreg, sd3)                              # [10,24,3]

    return dict(vt=vt, sd=sd, pd=pd, lbswT=lbswT, jreg54T=jreg54T,
                J_template=J_template, J_shapedirs=J_shapedirs)


def _pad_rows(x, n):
    if x.shape[0] == n:
        return x
    return jnp.pad(x, [(0, n - x.shape[0])] + [(0, 0)] * (x.ndim - 1))


def smpl_wrapper_forward(params_pred, model, use_pallas=True):
    """SMPLWrapper.forward: params split, 6D->axis-angle, SMPL LBS, projection."""
    Bn = params_pred.shape[0]
    BP = ((Bn + SUBLANE - 1) // SUBLANE) * SUBLANE          # fill the sublane axis

    cam = params_pred[:, 0:CAM_DIM]
    go6d = params_pred[:, CAM_DIM:CAM_DIM + ROT_DIM]
    bp6d = params_pred[:, CAM_DIM + ROT_DIM:CAM_DIM + ROT_DIM + (NJ - 1) * ROT_DIM]
    betas = params_pred[:, CAM_DIM + ROT_DIM + (NJ - 1) * ROT_DIM:PARAMS_NUM]

    rot6d = jnp.concatenate([go6d, bp6d], axis=1).reshape(Bn * NJ, 6)
    rotmats = rot6d_to_rotmat(rot6d)                                       # [B*24,3,3]
    poses = rotmat_to_axis_angle(rotmats).reshape(Bn, NJ * 3)              # rot6D_to_angular
    global_orient, body_pose = poses[:, :3], poses[:, 3:]
    rotmats = rotmats.reshape(Bn, NJ, 3, 3)
    pose_feature = (rotmats[:, 1:] - jnp.eye(3, dtype=rotmats.dtype)).reshape(Bn, NPOSEFEAT)

    # rest-pose joints (exact factorization -> no vertex-sized intermediate needed)
    J = model['J_template'][None] + jnp.einsum('bl,ljc->bjc', betas, model['J_shapedirs'])
    A12, joints_smpl24 = batch_rigid_transform(rotmats, J)                 # [B,24,12]

    # kernel-side layouts: batch padded to BP=8 sublanes, bf16 casts done in the
    # wrapper, pose_feature K lane-padded, A2 as [12*BP, 24] so each component
    # slice starts on an 8-sublane boundary.
    betas_p = _pad_rows(betas, BP).astype(jnp.bfloat16)
    pf_p = _pad_rows(jnp.pad(pose_feature, ((0, 0), (0, PF_PAD - NPOSEFEAT))),
                     BP).astype(jnp.bfloat16)
    cam_p = _pad_rows(cam, BP)
    A2 = jnp.transpose(_pad_rows(A12, BP), (2, 0, 1)).reshape(12 * BP, NJ)

    lbs = smpl_lbs_pallas if use_pallas else smpl_lbs_reference
    v_out, v_cam, j3, pj = lbs(betas_p, pf_p, cam_p, A2, model)

    # planar (lane-dense) kernel outputs -> original module layouts.
    # TODO(synk): skip these transposes entirely if downstream accepts planar [B,3,V].
    verts = jnp.transpose(v_out[:Bn].reshape(Bn, 3, V), (0, 2, 1))             # [B,V,3]
    verts_camed = jnp.transpose(v_cam[:Bn].reshape(Bn, 3, V), (0, 2, 1))       # [B,V,3]
    j3d = jnp.transpose(j3.reshape(3, BP, JPAD)[:, :Bn, :NJ54], (1, 2, 0))     # [B,54,3]
    pj2d = jnp.transpose(pj.reshape(2, BP, JPAD)[:, :Bn, :NJ54], (1, 2, 0))    # [B,54,2]

    params = {'cam': cam, 'global_orient': global_orient, 'body_pose': body_pose,
              'poses': poses, 'betas': betas}
    # TODO(synk): forward_refine / recalc_outputs, the perspective-projection branch
    # of vertices_kp3d_projection and the OpenPose-25 remap are not implemented.
    return {'params': params, 'verts': verts, 'j3d': j3d,
            'joints_smpl24': joints_smpl24, 'verts_camed': verts_camed, 'pj2d': pj2d}


# ----------------------------- main -------------------------------------------
if __name__ == "__main__":
    key = jax.random.PRNGKey(0)
    k_model, k_in = jax.random.split(key)
    model = init_model(k_model)
    params_pred = jax.random.normal(k_in, (B, PARAMS_NUM), jnp.float32)

    fwd = jax.jit(functools.partial(smpl_wrapper_forward, use_pallas=True))
    out = fwd(params_pred, model)
    jax.block_until_ready(out)

    # validate against a pure-JAX reference of the same math / layout
    ref = smpl_wrapper_forward(params_pred, model, use_pallas=False)
    for k in ('verts', 'verts_camed', 'j3d', 'pj2d'):
        np.testing.assert_allclose(np.asarray(out[k]), np.asarray(ref[k]),
                                   rtol=2e-3, atol=2e-3)
    assert out['verts'].shape == (B, V, 3)
    assert out['verts_camed'].shape == (B, V, 3)
    assert out['j3d'].shape == (B, NJ54, 3)
    assert out['joints_smpl24'].shape == (B, NJ, 3)
    assert out['pj2d'].shape == (B, NJ54, 2)
    assert out['params']['poses'].shape == (B, NJ * 3)
    print("KERNEL_OK")
</pallas_src>

<mosaic_0001>
module attributes {stable_mosaic.version = 11 : i64} {
  func.func @_smpl_lbs_kernel(%arg0: memref<8x10xbf16, #tpu.memory_space<vmem>>, %arg1: memref<8x256xbf16, #tpu.memory_space<vmem>>, %arg2: memref<8x3xf32, #tpu.memory_space<vmem>>, %arg3: memref<96x24xf32, #tpu.memory_space<vmem>>, %arg4: memref<1x1536xf32, #tpu.memory_space<vmem>>, %arg5: memref<10x1536xbf16, #tpu.memory_space<vmem>>, %arg6: memref<256x1536xbf16, #tpu.memory_space<vmem>>, %arg7: memref<24x512xf32, #tpu.memory_space<vmem>>, %arg8: memref<512x128xf32, #tpu.memory_space<vmem>>, %arg9: memref<8x1536xf32, #tpu.memory_space<vmem>>, %arg10: memref<8x1536xf32, #tpu.memory_space<vmem>>, %arg11: memref<24x128xf32, #tpu.memory_space<vmem>>, %arg12: memref<16x128xf32, #tpu.memory_space<vmem>>) attributes {dimension_semantics = [], scalar_prefetch = 0 : i64, scratch_operands = 0 : i64, tpu.core_type = #tpu.core_type<tc>} {
    %c0 = arith.constant 0 : index
    %c0_0 = arith.constant 0 : index
    %0 = vector.load %arg4[%c0, %c0_0] : memref<1x1536xf32, #tpu.memory_space<vmem>>, vector<1x1536xf32>
    %c0_1 = arith.constant 0 : index
    %c0_2 = arith.constant 0 : index
    %1 = vector.load %arg0[%c0_1, %c0_2] : memref<8x10xbf16, #tpu.memory_space<vmem>>, vector<8x10xbf16>
    %c0_3 = arith.constant 0 : index
    %c0_4 = arith.constant 0 : index
    %2 = vector.load %arg5[%c0_3, %c0_4] : memref<10x1536xbf16, #tpu.memory_space<vmem>>, vector<10x1536xbf16>
    %cst = arith.constant dense<0.000000e+00> : vector<8x1536xf32>
    %3 = tpu.matmul %1, %2, %cst {dimension_numbers = #tpu.dot_dimension_numbers<[1], [0], [0], [1], [0, 0, 1, 1], [], []>} : vector<8x10xbf16>, vector<10x1536xbf16>, vector<8x1536xf32> -> vector<8x1536xf32>
    %4 = vector.broadcast %0 : vector<1x1536xf32> to vector<8x1536xf32>
    %5 = arith.addf %4, %3 : vector<8x1536xf32>
    %c0_5 = arith.constant 0 : index
    %c0_6 = arith.constant 0 : index
    %6 = vector.load %arg1[%c0_5, %c0_6] : memref<8x256xbf16, #tpu.memory_space<vmem>>, vector<8x256xbf16>
    %c0_7 = arith.constant 0 : index
    %c0_8 = arith.constant 0 : index
    %7 = vector.load %arg6[%c0_7, %c0_8] : memref<256x1536xbf16, #tpu.memory_space<vmem>>, vector<256x1536xbf16>
    %cst_9 = arith.constant dense<0.000000e+00> : vector<8x1536xf32>
    %8 = tpu.matmul %6, %7, %cst_9 {dimension_numbers = #tpu.dot_dimension_numbers<[1], [0], [0], [1], [0, 0, 1, 1], [], []>} : vector<8x256xbf16>, vector<256x1536xbf16>, vector<8x1536xf32> -> vector<8x1536xf32>
    %9 = arith.addf %5, %8 : vector<8x1536xf32>
    %c0_10 = arith.constant 0 : index
    %c0_11 = arith.constant 0 : index
    %10 = vector.load %arg3[%c0_10, %c0_11] : memref<96x24xf32, #tpu.memory_space<vmem>>, vector<96x24xf32>
    %c0_12 = arith.constant 0 : index
    %c0_13 = arith.constant 0 : index
    %11 = vector.load %arg7[%c0_12, %c0_13] : memref<24x512xf32, #tpu.memory_space<vmem>>, vector<24x512xf32>
    %cst_14 = arith.constant dense<0.000000e+00> : vector<96x512xf32>
    %12 = tpu.matmul %10, %11, %cst_14 {dimension_numbers = #tpu.dot_dimension_numbers<[1], [0], [0], [1], [0, 0, 1, 1], [], []>} : vector<96x24xf32>, vector<24x512xf32>, vector<96x512xf32> -> vector<96x512xf32>
    %13 = vector.extract_strided_slice %9 {offsets = [0, 0], sizes = [8, 512], strides = [1, 1]} : vector<8x1536xf32> to vector<8x512xf32>
    %14 = vector.extract_strided_slice %9 {offsets = [0, 512], sizes = [8, 512], strides = [1, 1]} : vector<8x1536xf32> to vector<8x512xf32>
    %15 = vector.extract_strided_slice %9 {offsets = [0, 1024], sizes = [8, 512], strides = [1, 1]} : vector<8x1536xf32> to vector<8x512xf32>
    %16 = vector.extract_strided_slice %12 {offsets = [0, 0], sizes = [8, 512], strides = [1, 1]} : vector<96x512xf32> to vector<8x512xf32>
    %17 = arith.mulf %16, %13 : vector<8x512xf32>
    %18 = vector.extract_strided_slice %12 {offsets = [8, 0], sizes = [8, 512], strides = [1, 1]} : vector<96x512xf32> to vector<8x512xf32>
    %19 = arith.mulf %18, %14 : vector<8x512xf32>
    %20 = arith.addf %17, %19 : vector<8x512xf32>
    %21 = vector.extract_strided_slice %12 {offsets = [16, 0], sizes = [8, 512], strides = [1, 1]} : vector<96x512xf32> to vector<8x512xf32>
    %22 = arith.mulf %21, %15 : vector<8x512xf32>
    %23 = arith.addf %20, %22 : vector<8x512xf32>
    %24 = vector.extract_strided_slice %12 {offsets = [72, 0], sizes = [8, 512], strides = [1, 1]} : vector<96x512xf32> to vector<8x512xf32>
    %25 = arith.addf %23, %24 : vector<8x512xf32>
    %26 = vector.extract_strided_slice %12 {offsets = [24, 0], sizes = [8, 512], strides = [1, 1]} : vector<96x512xf32> to vector<8x512xf32>
    %27 = arith.mulf %26, %13 : vector<8x512xf32>
    %28 = vector.extract_strided_slice %12 {offsets = [32, 0], sizes = [8, 512], strides = [1, 1]} : vector<96x512xf32> to vector<8x512xf32>
    %29 = arith.mulf %28, %14 : vector<8x512xf32>
    %30 = arith.addf %27, %29 : vector<8x512xf32>
    %31 = vector.extract_strided_slice %12 {offsets = [40, 0], sizes = [8, 512], strides = [1, 1]} : vector<96x512xf32> to vector<8x512xf32>
    %32 = arith.mulf %31, %15 : vector<8x512xf32>
    %33 = arith.addf %30, %32 : vector<8x512xf32>
    %34 = vector.extract_strided_slice %12 {offsets = [80, 0], sizes = [8, 512], strides = [1, 1]} : vector<96x512xf32> to vector<8x512xf32>
    %35 = arith.addf %33, %34 : vector<8x512xf32>
    %36 = vector.extract_strided_slice %12 {offsets = [48, 0], sizes = [8, 512], strides = [1, 1]} : vector<96x512xf32> to vector<8x512xf32>
    %37 = arith.mulf %36, %13 : vector<8x512xf32>
    %38 = vector.extract_strided_slice %12 {offsets = [56, 0], sizes = [8, 512], strides = [1, 1]} : vector<96x512xf32> to vector<8x512xf32>
    %39 = arith.mulf %38, %14 : vector<8x512xf32>
    %40 = arith.addf %37, %39 : vector<8x512xf32>
    %41 = vector.extract_strided_slice %12 {offsets = [64, 0], sizes = [8, 512], strides = [1, 1]} : vector<96x512xf32> to vector<8x512xf32>
    %42 = arith.mulf %41, %15 : vector<8x512xf32>
    %43 = arith.addf %40, %42 : vector<8x512xf32>
    %44 = vector.extract_strided_slice %12 {offsets = [88, 0], sizes = [8, 512], strides = [1, 1]} : vector<96x512xf32> to vector<8x512xf32>
    %45 = arith.addf %43, %44 : vector<8x512xf32>
    %c0_15 = arith.constant 0 : index
    %c0_16 = arith.constant 0 : index
    %46 = vector.load %arg9[%c0_15, %c0_16] : memref<8x1536xf32, #tpu.memory_space<vmem>>, vector<8x512xf32>
    tpu.vector_store %arg9[%c0_15, %c0_16], %25 {strides = array<i32>} : memref<8x1536xf32, #tpu.memory_space<vmem>>, vector<8x512xf32>,
    %c0_17 = arith.constant 0 : index
    %c512 = arith.constant 512 : index
    %47 = vector.load %arg9[%c0_17, %c512] : memref<8x1536xf32, #tpu.memory_space<vmem>>, vector<8x512xf32>
    tpu.vector_store %arg9[%c0_17, %c512], %35 {strides = array<i32>} : memref<8x1536xf32, #tpu.memory_space<vmem>>, vector<8x512xf32>,
    %c0_18 = arith.constant 0 : index
    %c1024 = arith.constant 1024 : index
    %48 = vector.load %arg9[%c0_18, %c1024] : memref<8x1536xf32, #tpu.memory_space<vmem>>, vector<8x512xf32>
    tpu.vector_store %arg9[%c0_18, %c1024], %45 {strides = array<i32>} : memref<8x1536xf32, #tpu.memory_space<vmem>>, vector<8x512xf32>,
    %c0_19 = arith.constant 0 : index
    %c0_20 = arith.constant 0 : index
    %49 = vector.load %arg2[%c0_19, %c0_20] : memref<8x3xf32, #tpu.memory_space<vmem>>, vector<8x3xf32>
    %50 = vector.extract_strided_slice %49 {offsets = [0, 0], sizes = [8, 1], strides = [1, 1]} : vector<8x3xf32> to vector<8x1xf32>
    %51 = vector.extract_strided_slice %49 {offsets = [0, 1], sizes = [8, 1], strides = [1, 1]} : vector<8x3xf32> to vector<8x1xf32>
    %52 = vector.extract_strided_slice %49 {offsets = [0, 2], sizes = [8, 1], strides = [1, 1]} : vector<8x3xf32> to vector<8x1xf32>
    %53 = vector.broadcast %50 : vector<8x1xf32> to vector<8x512xf32>
    %54 = arith.mulf %25, %53 : vector<8x512xf32>
    %55 = vector.broadcast %51 : vector<8x1xf32> to vector<8x512xf32>
    %56 = arith.addf %54, %55 : vector<8x512xf32>
    %c0_21 = arith.constant 0 : index
    %c0_22 = arith.constant 0 : index
    %57 = vector.load %arg10[%c0_21, %c0_22] : memref<8x1536xf32, #tpu.memory_space<vmem>>, vector<8x512xf32>
    tpu.vector_store %arg10[%c0_21, %c0_22], %56 {strides = array<i32>} : memref<8x1536xf32, #tpu.memory_space<vmem>>, vector<8x512xf32>,
    %58 = vector.broadcast %50 : vector<8x1xf32> to vector<8x512xf32>
    %59 = arith.mulf %35, %58 : vector<8x512xf32>
    %60 = vector.broadcast %52 : vector<8x1xf32> to vector<8x512xf32>
    %61 = arith.addf %59, %60 : vector<8x512xf32>
    %c0_23 = arith.constant 0 : index
    %c512_24 = arith.constant 512 : index
    %62 = vector.load %arg10[%c0_23, %c512_24] : memref<8x1536xf32, #tpu.memory_space<vmem>>, vector<8x512xf32>
    tpu.vector_store %arg10[%c0_23, %c512_24], %61 {strides = array<i32>} : memref<8x1536xf32, #tpu.memory_space<vmem>>, vector<8x512xf32>,
    %c0_25 = arith.constant 0 : index
    %c1024_26 = arith.constant 1024 : index
    %63 = vector.load %arg10[%c0_25, %c1024_26] : memref<8x1536xf32, #tpu.memory_space<vmem>>, vector<8x512xf32>
    tpu.vector_store %arg10[%c0_25, %c1024_26], %45 {strides = array<i32>} : memref<8x1536xf32, #tpu.memory_space<vmem>>, vector<8x512xf32>,
    %c0_27 = arith.constant 0 : index
    %c0_28 = arith.constant 0 : index
    %64 = vector.load %arg8[%c0_27, %c0_28] : memref<512x128xf32, #tpu.memory_space<vmem>>, vector<512x128xf32>
    %cst_29 = arith.constant dense<0.000000e+00> : vector<8x128xf32>
    %65 = tpu.matmul %25, %64, %cst_29 {dimension_numbers = #tpu.dot_dimension_numbers<[1], [0], [0], [1], [0, 0, 1, 1], [], []>} : vector<8x512xf32>, vector<512x128xf32>, vector<8x128xf32> -> vector<8x128xf32>
    %cst_30 = arith.constant dense<0.000000e+00> : vector<8x128xf32>
    %66 = tpu.matmul %35, %64, %cst_30 {dimension_numbers = #tpu.dot_dimension_numbers<[1], [0], [0], [1], [0, 0, 1, 1], [], []>} : vector<8x512xf32>, vector<512x128xf32>, vector<8x128xf32> -> vector<8x128xf32>
    %cst_31 = arith.constant dense<0.000000e+00> : vector<8x128xf32>
    %67 = tpu.matmul %45, %64, %cst_31 {dimension_numbers = #tpu.dot_dimension_numbers<[1], [0], [0], [1], [0, 0, 1, 1], [], []>} : vector<8x512xf32>, vector<512x128xf32>, vector<8x128xf32> -> vector<8x128xf32>
    %c0_32 = arith.constant 0 : index
    %c0_33 = arith.constant 0 : index
    %68 = vector.load %arg11[%c0_32, %c0_33] : memref<24x128xf32, #tpu.memory_space<vmem>>, vector<8x128xf32>
    tpu.vector_store %arg11[%c0_32, %c0_33], %65 {strides = array<i32>} : memref<24x128xf32, #tpu.memory_space<vmem>>, vector<8x128xf32>,
    %c8 = arith.constant 8 : index
    %c0_34 = arith.constant 0 : index
    %69 = vector.load %arg11[%c8, %c0_34] : memref<24x128xf32, #tpu.memory_space<vmem>>, vector<8x128xf32>
    tpu.vector_store %arg11[%c8, %c0_34], %66 {strides = array<i32>} : memref<24x128xf32, #tpu.memory_space<vmem>>, vector<8x128xf32>,
    %c16 = arith.constant 16 : index
    %c0_35 = arith.constant 0 : index
    %70 = vector.load %arg11[%c16, %c0_35] : memref<24x128xf32, #tpu.memory_space<vmem>>, vector<8x128xf32>
    tpu.vector_store %arg11[%c16, %c0_35], %67 {strides = array<i32>} : memref<24x128xf32, #tpu.memory_space<vmem>>, vector<8x128xf32>,
    %71 = vector.broadcast %50 : vector<8x1xf32> to vector<8x128xf32>
    %72 = arith.mulf %65, %71 : vector<8x128xf32>
    %73 = vector.broadcast %51 : vector<8x1xf32> to vector<8x128xf32>
    %74 = arith.addf %72, %73 : vector<8x128xf32>
    %c0_36 = arith.constant 0 : index
    %c0_37 = arith.constant 0 : index
    %75 = vector.load %arg12[%c0_36, %c0_37] : memref<16x128xf32, #tpu.memory_space<vmem>>, vector<8x128xf32>
    tpu.vector_store %arg12[%c0_36, %c0_37], %74 {strides = array<i32>} : memref<16x128xf32, #tpu.memory_space<vmem>>, vector<8x128xf32>,
    %76 = vector.broadcast %50 : vector<8x1xf32> to vector<8x128xf32>
    %77 = arith.mulf %66, %76 : vector<8x128xf32>
    %78 = vector.broadcast %52 : vector<8x1xf32> to vector<8x128xf32>
    %79 = arith.addf %77, %78 : vector<8x128xf32>
    %c8_38 = arith.constant 8 : index
    %c0_39 = arith.constant 0 : index
    %80 = vector.load %arg12[%c8_38, %c0_39] : memref<16x128xf32, #tpu.memory_space<vmem>>, vector<8x128xf32>
    tpu.vector_store %arg12[%c8_38, %c0_39], %79 {strides = array<i32>} : memref<16x128xf32, #tpu.memory_space<vmem>>, vector<8x128xf32>,
    return
  }
}

</mosaic_0001>

<llo_original>
// kernel: smpl_wrapper_forward.1
$region0: #{smpl_wrapper_forward.1}
  #allocation0 [shape = 'u32[]', space=smem, size = 0x4, offset = 0x4, fixed_abs, tag = 'smem constant byte address 0x4 - core index']
  #allocation1 [shape = 'u32[144,128]{1,0:T(1,128)}', space=vmem, size = 0x12000, scoped, tag = 'internal scratch']
  %s0 = inlined_call_operand.vmem [shape: bf16[8,10], index: 0, kind: input, shape index: {}]
  %s1 = inlined_call_operand.vmem [shape: bf16[8,256], index: 1, kind: input, shape index: {}]
  %s2 = inlined_call_operand.vmem [shape: f32[8,3], index: 2, kind: input, shape index: {}]
  %s3 = inlined_call_operand.vmem [shape: f32[96,24], index: 3, kind: input, shape index: {}]
  %s4 = inlined_call_operand.vmem [shape: f32[1,1536], index: 4, kind: input, shape index: {}]
  %s5 = inlined_call_operand.vmem [shape: bf16[10,1536], index: 5, kind: input, shape index: {}]
  %s6 = inlined_call_operand.vmem [shape: bf16[256,1536], index: 6, kind: input, shape index: {}]
  %s7 = inlined_call_operand.vmem [shape: f32[24,512], index: 7, kind: input, shape index: {}]
  %s8 = inlined_call_operand.vmem [shape: f32[512,128], index: 8, kind: input, shape index: {}]
  %s9 = inlined_call_operand.vmem [shape: f32[8,1536], index: 9, kind: output, shape index: {0}]
  %s10 = inlined_call_operand.vmem [shape: f32[8,1536], index: 10, kind: output, shape index: {1}]
  %s11 = inlined_call_operand.vmem [shape: f32[24,128], index: 11, kind: output, shape index: {2}]
  %s12 = inlined_call_operand.vmem [shape: f32[16,128], index: 12, kind: output, shape index: {3}]
  %13 = xla_tuple %s9, %s10, %s11, %s12
  %s14 = sld [smem:[#allocation0]]
  $region70: #{smpl_wrapper_forward.1} parent=0
    _
  %s16 = ssub.s32 1, %s14
  %s17 = scalar_select 0, %s16, %s14
  // Predicated region
  $region2: #{smpl_wrapper_forward.1} parent=0 // pred_check
    _
  $region3: #{smpl_wrapper_forward.1} parent=0 // pred_check_branch
    %19 = sbr.rel (0) target = $region5
  $region4: #{smpl_wrapper_forward.1} parent=0 // pred_region
    _
  $region5: #{smpl_wrapper_forward.1} parent=0 // pred_fallthru
    _
  // Predicated region
  $region6: #{smpl_wrapper_forward.1} parent=0 // pred_check
    _
  $region7: #{smpl_wrapper_forward.1} parent=0 // pred_check_branch
    %21 = sbr.rel (0) target = $region9
  $region8: #{smpl_wrapper_forward.1} parent=0 // pred_region
    _
  $region9: #{smpl_wrapper_forward.1} parent=0 // pred_fallthru
    _
  // Predicated region
  $region10: #{smpl_wrapper_forward.1} parent=0 // pred_check
    _
  $region11: #{smpl_wrapper_forward.1} parent=0 // pred_check_branch
    %23 = sbr.rel (0) target = $region13
  $region12: #{smpl_wrapper_forward.1} parent=0 // pred_region
    _
  $region13: #{smpl_wrapper_forward.1} parent=0 // pred_fallthru
    _
  // Predicated region
  $region14: #{smpl_wrapper_forward.1} parent=0 // pred_check
    _
  $region15: #{smpl_wrapper_forward.1} parent=0 // pred_check_branch
    %25 = sbr.rel (0) target = $region17
  $region16: #{smpl_wrapper_forward.1} parent=0 // pred_region
    _
  $region17: #{smpl_wrapper_forward.1} parent=0 // pred_fallthru
    _
  // Predicated region
  $region18: #{smpl_wrapper_forward.1} parent=0 // pred_check
    _
  $region19: #{smpl_wrapper_forward.1} parent=0 // pred_check_branch
    %27 = sbr.rel (0) target = $region21
  $region20: #{smpl_wrapper_forward.1} parent=0 // pred_region
    _
  $region21: #{smpl_wrapper_forward.1} parent=0 // pred_fallthru
    _
  // Predicated region
  $region22: #{smpl_wrapper_forward.1} parent=0 // pred_check
    _
  $region23: #{smpl_wrapper_forward.1} parent=0 // pred_check_branch
    %29 = sbr.rel (0) target = $region25
  $region24: #{smpl_wrapper_forward.1} parent=0 // pred_region
    _
  $region25: #{smpl_wrapper_forward.1} parent=0 // pred_fallthru
    _
  // Predicated region
  $region26: #{smpl_wrapper_forward.1} parent=0 // pred_check
    _
  $region27: #{smpl_wrapper_forward.1} parent=0 // pred_check_branch
    %31 = sbr.rel (0) target = $region29
  $region28: #{smpl_wrapper_forward.1} parent=0 // pred_region
    _
  $region29: #{smpl_wrapper_forward.1} parent=0 // pred_fallthru
    _
  // Predicated region
  $region30: #{smpl_wrapper_forward.1} parent=0 // pred_check
    _
  $region31: #{smpl_wrapper_forward.1} parent=0 // pred_check_branch
    %33 = sbr.rel (0) target = $region33
  $region32: #{smpl_wrapper_forward.1} parent=0 // pred_region
    _
  $region33: #{smpl_wrapper_forward.1} parent=0 // pred_fallthru
    _
  // Predicated region
  $region34: #{smpl_wrapper_forward.1} parent=0 // pred_check
    _
  $region35: #{smpl_wrapper_forward.1} parent=0 // pred_check_branch
    %35 = sbr.rel (0) target = $region37
  $region36: #{smpl_wrapper_forward.1} parent=0 // pred_region
    _
  $region37: #{smpl_wrapper_forward.1} parent=0 // pred_fallthru
    _
  %v37 = vld [vmem:[%s4] sm:$0xff]
  %v38 = vld [vmem:[%s4 + $0x8] sm:$0xf]
  %v39 = vld [vmem:[%s0] sm:$0xf]
  %v40 = vld [vmem:[%s5] sm:$0xff]
  %v41 = vld [vmem:[%s5 + $0x8] sm:$0xff]
  %v42 = vld [vmem:[%s5 + $0x10] sm:$0xff]
  %v43 = vld [vmem:[%s5 + $0x18] sm:$0xff]
  %v44 = vld [vmem:[%s5 + $0x20] sm:$0xff]
  %v45 = vld [vmem:[%s5 + $0x28] sm:$0xff]
  %v46 = vld [vmem:[%s5 + $0x30] sm:$0x11]
  %v47 = vld [vmem:[%s5 + $0x38] sm:$0x11]
  %v48 = vld [vmem:[%s5 + $0x40] sm:$0x11]
  %v49 = vld [vmem:[%s5 + $0x48] sm:$0x11]
  %v50 = vld [vmem:[%s5 + $0x50] sm:$0x11]
  %v51 = vld [vmem:[%s5 + $0x58] sm:$0x11]
  %v64 = vunpack.c.l.b16 %v40
  %v65 = vunpack.c.h.b16 %v40
  %v66 = vunpack.c.l.b16 %v41
  %v67 = vunpack.c.h.b16 %v41
  %v68 = vunpack.c.l.b16 %v42
  %v69 = vunpack.c.h.b16 %v42
  %v70 = vunpack.c.l.b16 %v43
  %v71 = vunpack.c.h.b16 %v43
  %v72 = vunpack.c.l.b16 %v44
  %v73 = vunpack.c.h.b16 %v44
  %v74 = vunpack.c.l.b16 %v45
  %v75 = vunpack.c.h.b16 %v45
  %v76 = vunpack.c.l.b16 %v46
  %v77 = vunpack.c.h.b16 %v46
  %v78 = vunpack.c.l.b16 %v47
  %v79 = vunpack.c.h.b16 %v47
  %v80 = vunpack.c.l.b16 %v48
  %v81 = vunpack.c.h.b16 %v48
  %v82 = vunpack.c.l.b16 %v49
  %v83 = vunpack.c.h.b16 %v49
  %v84 = vunpack.c.l.b16 %v50
  %v85 = vunpack.c.h.b16 %v50
  %v86 = vunpack.c.l.b16 %v51
  %v87 = vunpack.c.h.b16 %v51
  %v88 = vpack.c.b16 %v76, %v64
  %v89 = vpack.c.b16 %v77, %v65
  %v90 = vpack.c.b16 %v78, %v66
  %v91 = vpack.c.b16 %v79, %v67
  %v92 = vpack.c.b16 %v80, %v68
  %v93 = vpack.c.b16 %v81, %v69
  %v94 = vpack.c.b16 %v82, %v70
  %v95 = vpack.c.b16 %v83, %v71
  %v96 = vpack.c.b16 %v84, %v72
  %v97 = vpack.c.b16 %v85, %v73
  %v98 = vpack.c.b16 %v86, %v74
  %v99 = vpack.c.b16 %v87, %v75
  %vm100 = vcmask 80896
  %v102 = vsel %vm100, %v39, 0
  %vm104 = vcmask 1044480
  %v106 = vsel %vm104, %v88, 0
  %v109 = vsel %vm104, %v89, 0
  %v112 = vsel %vm104, %v90, 0
  %v115 = vsel %vm104, %v91, 0
  %v118 = vsel %vm104, %v92, 0
  %v121 = vsel %vm104, %v93, 0
  %v124 = vsel %vm104, %v94, 0
  %v127 = vsel %vm104, %v95, 0
  %v130 = vsel %vm104, %v96, 0
  %v133 = vsel %vm104, %v97, 0
  %v136 = vsel %vm104, %v98, 0
  %v139 = vsel %vm104, %v99, 0
  %141 = vmatprep.subr.bf16.mxu0 %v109
  %142 = vmatpush1.bf16.msra.mxu0 %v106
  %143 = vmatprep.subr.bf16.mxu0 0
  %144 = vmatpush1.bf16.msra.mxu0 0
  %145 = vmatprep.subr.bf16.mxu0 0
  %146 = vmatpush1.bf16.msra.mxu0 0
  %147 = vmatprep.subr.bf16.mxu0 0
  %148 = vmatpush1.bf16.msra.mxu0 0
  %149 = vmatprep.subr.bf16.mxu0 0
  %150 = vmatpush1.bf16.msra.mxu0 0
  %151 = vmatprep.subr.bf16.mxu0 0
  %152 = vmatpush1.bf16.msra.mxu0 0
  %153 = vmatprep.subr.bf16.mxu0 0
  %154 = vmatpush1.bf16.msra.mxu0 0
  %155 = vmatprep.subr.bf16.mxu0 0
  %156 = vmatpush1.bf16.msra.mxu0 0
  %157 = vmatprep.subr.bf16.mxu0 0
  %158 = vmatpush1.bf16.msra.mxu0 0
  %159 = vmatprep.subr.bf16.mxu0 0
  %160 = vmatpush1.bf16.msra.mxu0 0
  %161 = vmatprep.subr.bf16.mxu0 0
  %162 = vmatpush1.bf16.msra.mxu0 0
  %163 = vmatprep.subr.bf16.mxu0 0
  %164 = vmatpush1.bf16.msra.mxu0 0
  %165 = vmatprep.subr.bf16.mxu0 0
  %166 = vmatpush1.bf16.msra.mxu0 0
  %167 = vmatprep.subr.bf16.mxu0 0
  %168 = vmatpush1.bf16.msra.mxu0 0
  %169 = vmatprep.subr.bf16.mxu0 0
  %170 = vmatpush1.bf16.msra.mxu0 0
  %171 = vmatprep.subr.bf16.mxu0 0
  %172 = vmatpush1.bf16.msra.mxu0 0
  %173 = vmatprep.mubr.bf16.mxu0 0
  %174 = vmatmul.mubr.bf16.gmra.mrb[0].mxu0 %v102
  %v175 = vpop.f32.mrb[0].mxu0
  %v176 = vadd.f32 0.0, %v175
  %v177 = vpop.f32.mrb[0].mxu0
  %v178 = vadd.f32 0.0, %v177
  %v179 = vpop.f32.mrb[0].mxu0
  %v180 = vpop.f32.mrb[0].mxu0
  %181 = vdwg.mxu0
  %182 = vmatprep.subr.bf16.mxu0 %v115
  %183 = vmatpush1.bf16.msra.mxu0 %v112
  %184 = vmatprep.subr.bf16.mxu0 0
  %185 = vmatpush1.bf16.msra.mxu0 0
  %186 = vmatprep.subr.bf16.mxu0 0
  %187 = vmatpush1.bf16.msra.mxu0 0
  %188 = vmatprep.subr.bf16.mxu0 0
  %189 = vmatpush1.bf16.msra.mxu0 0
  %190 = vmatprep.subr.bf16.mxu0 0
  %191 = vmatpush1.bf16.msra.mxu0 0
  %192 = vmatprep.subr.bf16.mxu0 0
  %193 = vmatpush1.bf16.msra.mxu0 0
  %194 = vmatprep.subr.bf16.mxu0 0
  %195 = vmatpush1.bf16.msra.mxu0 0
  %196 = vmatprep.subr.bf16.mxu0 0
  %197 = vmatpush1.bf16.msra.mxu0 0
  %198 = vmatprep.subr.bf16.mxu0 0
  %199 = vmatpush1.bf16.msra.mxu0 0
  %200 = vmatprep.subr.bf16.mxu0 0
  %201 = vmatpush1.bf16.msra.mxu0 0
  %202 = vmatprep.subr.bf16.mxu0 0
  %203 = vmatpush1.bf16.msra.mxu0 0
  %204 = vmatprep.subr.bf16.mxu0 0
  %205 = vmatpush1.bf16.msra.mxu0 0
  %206 = vmatprep.subr.bf16.mxu0 0
  %207 = vmatpush1.bf16.msra.mxu0 0
  %208 = vmatprep.subr.bf16.mxu0 0
  %209 = vmatpush1.bf16.msra.mxu0 0
  %210 = vmatprep.subr.bf16.mxu0 0
  %211 = vmatpush1.bf16.msra.mxu0 0
  %212 = vmatprep.subr.bf16.mxu0 0
  %213 = vmatpush1.bf16.msra.mxu0 0
  %214 = vmatprep.mubr.bf16.mxu0 0
  %215 = vmatmul.mubr.bf16.gmra.mrb[0].mxu0 %v102
  %v216 = vpop.f32.mrb[0].mxu0
  %v217 = vadd.f32 0.0, %v216
  %v218 = vpop.f32.mrb[0].mxu0
  %v219 = vadd.f32 0.0, %v218
  %v220 = vpop.f32.mrb[0].mxu0
  %v221 = vpop.f32.mrb[0].mxu0
  %222 = vdwg.mxu0
  %223 = vmatprep.subr.bf16.mxu0 %v121
  %224 = vmatpush1.bf16.msra.mxu0 %v118
  %225 = vmatprep.subr.bf16.mxu0 0
  %226 = vmatpush1.bf16.msra.mxu0 0
  %227 = vmatprep.subr.bf16.mxu0 0
  %228 = vmatpush1.bf16.msra.mxu0 0
  %229 = vmatprep.subr.bf16.mxu0 0
  %230 = vmatpush1.bf16.msra.mxu0 0
  %231 = vmatprep.subr.bf16.mxu0 0
  %232 = vmatpush1.bf16.msra.mxu0 0
  %233 = vmatprep.subr.bf16.mxu0 0
  %234 = vmatpush1.bf16.msra.mxu0 0
  %235 = vmatprep.subr.bf16.mxu0 0
  %236 = vmatpush1.bf16.msra.mxu0 0
  %237 = vmatprep.subr.bf16.mxu0 0
  %238 = vmatpush1.bf16.msra.mxu0 0
  %239 = vmatprep.subr.bf16.mxu0 0
  %240 = vmatpush1.bf16.msra.mxu0 0
  %241 = vmatprep.subr.bf16.mxu0 0
  %242 = vmatpush1.bf16.msra.mxu0 0
  %243 = vmatprep.subr.bf16.mxu0 0
  %244 = vmatpush1.bf16.msra.mxu0 0
  %245 = vmatprep.subr.bf16.mxu0 0
  %246 = vmatpush1.bf16.msra.mxu0 0
  %247 = vmatprep.subr.bf16.mxu0 0
  %248 = vmatpush1.bf16.msra.mxu0 0
  %249 = vmatprep.subr.bf16.mxu0 0
  %250 = vmatpush1.bf16.msra.mxu0 0
  %251 = vmatprep.subr.bf16.mxu0 0
  %252 = vmatpush1.bf16.msra.mxu0 0
  %253 = vmatprep.subr.bf16.mxu0 0
  %254 = vmatpush1.bf16.msra.mxu0 0
  %255 = vmatprep.mubr.bf16.mxu0 0
  %256 = vmatmul.mubr.bf16.gmra.mrb[0].mxu0 %v102
  %v257 = vpop.f32.mrb[0].mxu0
  %v258 = vadd.f32 0.0, %v257
  %v259 = vpop.f32.mrb[0].mxu0
  %v260 = vadd.f32 0.0, %v259
  %v261 = vpop.f32.mrb[0].mxu0
  %v262 = vpop.f32.mrb[0].mxu0
  %263 = vdwg.mxu0
  %264 = vmatprep.subr.bf16.mxu0 %v127
  %265 = vmatpush1.bf16.msra.mxu0 %v124
  %266 = vmatprep.subr.bf16.mxu0 0
  %267 = vmatpush1.bf16.msra.mxu0 0
  %268 = vmatprep.subr.bf16.mxu0 0
  %269 = vmatpush1.bf16.msra.mxu0 0
  %270 = vmatprep.subr.bf16.mxu0 0
  %271 = vmatpush1.bf16.msra.mxu0 0
  %272 = vmatprep.subr.bf16.mxu0 0
  %273 = vmatpush1.bf16.msra.mxu0 0
  %274 = vmatprep.subr.bf16.mxu0 0
  %275 = vmatpush1.bf16.msra.mxu0 0
  %276 = vmatprep.subr.bf16.mxu0 0
  %277 = vmatpush1.bf16.msra.mxu0 0
  %278 = vmatprep.subr.bf16.mxu0 0
  %279 = vmatpush1.bf16.msra.mxu0 0
  %280 = vmatprep.subr.bf16.mxu0 0
  %281 = vmatpush1.bf16.msra.mxu0 0
  %282 = vmatprep.subr.bf16.mxu0 0
  %283 = vmatpush1.bf16.msra.mxu0 0
  %284 = vmatprep.subr.bf16.mxu0 0
  %285 = vmatpush1.bf16.msra.mxu0 0
  %286 = vmatprep.subr.bf16.mxu0 0
  %287 = vmatpush1.bf16.msra.mxu0 0
  %288 = vmatprep.subr.bf16.mxu0 0
  %289 = vmatpush1.bf16.msra.mxu0 0
  %290 = vmatprep.subr.bf16.mxu0 0
  %291 = vmatpush1.bf16.msra.mxu0 0
  %292 = vmatprep.subr.bf16.mxu0 0
  %293 = vmatpush1.bf16.msra.mxu0 0
  %294 = vmatprep.subr.bf16.mxu0 0
  %295 = vmatpush1.bf16.msra.mxu0 0
  %296 = vmatprep.mubr.bf16.mxu0 0
  %297 = vmatmul.mubr.bf16.gmra.mrb[0].mxu0 %v102
  %v298 = vpop.f32.mrb[0].mxu0
  %v299 = vadd.f32 0.0, %v298
  %v300 = vpop.f32.mrb[0].mxu0
  %v301 = vadd.f32 0.0, %v300
  %v302 = vpop.f32.mrb[0].mxu0
  %v303 = vpop.f32.mrb[0].mxu0
  %304 = vdwg.mxu0
  %305 = vmatprep.subr.bf16.mxu0 %v133
  %306 = vmatpush1.bf16.msra.mxu0 %v130
  %307 = vmatprep.subr.bf16.mxu0 0
  %308 = vmatpush1.bf16.msra.mxu0 0
  %309 = vmatprep.subr.bf16.mxu0 0
  %310 = vmatpush1.bf16.msra.mxu0 0
  %311 = vmatprep.subr.bf16.mxu0 0
  %312 = vmatpush1.bf16.msra.mxu0 0
  %313 = vmatprep.subr.bf16.mxu0 0
  %314 = vmatpush1.bf16.msra.mxu0 0
  %315 = vmatprep.subr.bf16.mxu0 0
  %316 = vmatpush1.bf16.msra.mxu0 0
  %317 = vmatprep.subr.bf16.mxu0 0
  %318 = vmatpush1.bf16.msra.mxu0 0
  %319 = vmatprep.subr.bf16.mxu0 0
  %320 = vmatpush1.bf16.msra.mxu0 0
  %321 = vmatprep.subr.bf16.mxu0 0
  %322 = vmatpush1.bf16.msra.mxu0 0
  %323 = vmatprep.subr.bf16.mxu0 0
  %324 = vmatpush1.bf16.msra.mxu0 0
  %325 = vmatprep.subr.bf16.mxu0 0
  %326 = vmatpush1.bf16.msra.mxu0 0
  %327 = vmatprep.subr.bf16.mxu0 0
  %328 = vmatpush1.bf16.msra.mxu0 0
  %329 = vmatprep.subr.bf16.mxu0 0
  %330 = vmatpush1.bf16.msra.mxu0 0
  %331 = vmatprep.subr.bf16.mxu0 0
  %332 = vmatpush1.bf16.msra.mxu0 0
  %333 = vmatprep.subr.bf16.mxu0 0
  %334 = vmatpush1.bf16.msra.mxu0 0
  %335 = vmatprep.subr.bf16.mxu0 0
  %336 = vmatpush1.bf16.msra.mxu0 0
  %337 = vmatprep.mubr.bf16.mxu0 0
  %338 = vmatmul.mubr.bf16.gmra.mrb[0].mxu0 %v102
  %v339 = vpop.f32.mrb[0].mxu0
  %v340 = vadd.f32 0.0, %v339
  %v341 = vpop.f32.mrb[0].mxu0
  %v342 = vadd.f32 0.0, %v341
  %v343 = vpop.f32.mrb[0].mxu0
  %v344 = vpop.f32.mrb[0].mxu0
  %345 = vdwg.mxu0
  %346 = vmatprep.subr.bf16.mxu0 %v139
  %347 = vmatpush1.bf16.msra.mxu0 %v136
  %348 = vmatprep.subr.bf16.mxu0 0
  %349 = vmatpush1.bf16.msra.mxu0 0
  %350 = vmatprep.subr.bf16.mxu0 0
  %351 = vmatpush1.bf16.msra.mxu0 0
  %352 = vmatprep.subr.bf16.mxu0 0
  %353 = vmatpush1.bf16.msra.mxu0 0
  %354 = vmatprep.subr.bf16.mxu0 0
  %355 = vmatpush1.bf16.msra.mxu0 0
  %356 = vmatprep.subr.bf16.mxu0 0
  %357 = vmatpush1.bf16.msra.mxu0 0
  %358 = vmatprep.subr.bf16.mxu0 0
  %359 = vmatpush1.bf16.msra.mxu0 0
  %360 = vmatprep.subr.bf16.mxu0 0
  %361 = vmatpush1.bf16.msra.mxu0 0
  %362 = vmatprep.subr.bf16.mxu0 0
  %363 = vmatpush1.bf16.msra.mxu0 0
  %364 = vmatprep.subr.bf16.mxu0 0
  %365 = vmatpush1.bf16.msra.mxu0 0
  %366 = vmatprep.subr.bf16.mxu0 0
  %367 = vmatpush1.bf16.msra.mxu0 0
  %368 = vmatprep.subr.bf16.mxu0 0
  %369 = vmatpush1.bf16.msra.mxu0 0
  %370 = vmatprep.subr.bf16.mxu0 0
  %371 = vmatpush1.bf16.msra.mxu0 0
  %372 = vmatprep.subr.bf16.mxu0 0
  %373 = vmatpush1.bf16.msra.mxu0 0
  %374 = vmatprep.subr.bf16.mxu0 0
  %375 = vmatpush1.bf16.msra.mxu0 0
  %376 = vmatprep.subr.bf16.mxu0 0
  %377 = vmatpush1.bf16.msra.mxu0 0
  %378 = vmatprep.mubr.bf16.mxu0 0
  %379 = vmatmul.mubr.bf16.gmra.mrb[0].mxu0 %v102
  %v380 = vpop.f32.mrb[0].mxu0
  %v381 = vadd.f32 0.0, %v380
  %v382 = vpop.f32.mrb[0].mxu0
  %v383 = vadd.f32 0.0, %v382
  %v384 = vpop.f32.mrb[0].mxu0
  %v385 = vpop.f32.mrb[0].mxu0
  %386 = vdwg.mxu0
  %v389 = vlaneseq
  %v390 = vshrl.u32 %v389, 7
  %v391 = vsub.s32 0, %v390
  %v392 = vrot.slane %v37, %v391
  %v393 = vlaneseq
  %v394 = vshrl.u32 %v393, 7
  %v395 = vsub.s32 1, %v394
  %v396 = vrot.slane %v37, %v395
  %v397 = vlaneseq
  %v398 = vshrl.u32 %v397, 7
  %v399 = vsub.s32 2, %v398
  %v400 = vrot.slane %v37, %v399
  %v401 = vlaneseq
  %v402 = vshrl.u32 %v401, 7
  %v403 = vsub.s32 3, %v402
  %v404 = vrot.slane %v37, %v403
  %v405 = vlaneseq
  %v406 = vshrl.u32 %v405, 7
  %v407 = vsub.s32 4, %v406
  %v408 = vrot.slane %v37, %v407
  %v409 = vlaneseq
  %v410 = vshrl.u32 %v409, 7
  %v411 = vsub.s32 5, %v410
  %v412 = vrot.slane %v37, %v411
  %v413 = vlaneseq
  %v414 = vshrl.u32 %v413, 7
  %v415 = vsub.s32 6, %v414
  %v416 = vrot.slane %v37, %v415
  %v417 = vlaneseq
  %v418 = vshrl.u32 %v417, 7
  %v419 = vsub.s32 7, %v418
  %v420 = vrot.slane %v37, %v419
  %v421 = vlaneseq
  %v422 = vshrl.u32 %v421, 7
  %v423 = vsub.s32 0, %v422
  %v424 = vrot.slane %v38, %v423
  %v425 = vlaneseq
  %v426 = vshrl.u32 %v425, 7
  %v427 = vsub.s32 1, %v426
  %v428 = vrot.slane %v38, %v427
  %v429 = vlaneseq
  %v430 = vshrl.u32 %v429, 7
  %v431 = vsub.s32 2, %v430
  %v432 = vrot.slane %v38, %v431
  %v433 = vlaneseq
  %v434 = vshrl.u32 %v433, 7
  %v435 = vsub.s32 3, %v434
  %v436 = vrot.slane %v38, %v435
  %v449 = vadd.f32 %v392, %v176
  %v450 = vadd.f32 %v396, %v178
  %v451 = vadd.f32 %v400, %v217
  %v452 = vadd.f32 %v404, %v219
  %v453 = vadd.f32 %v408, %v258
  %v454 = vadd.f32 %v412, %v260
  %v455 = vadd.f32 %v416, %v299
  %v456 = vadd.f32 %v420, %v301
  %v457 = vadd.f32 %v424, %v340
  %v458 = vadd.f32 %v428, %v342
  %v459 = vadd.f32 %v432, %v381
  %v460 = vadd.f32 %v436, %v383
  %v461 = vld [vmem:[%s1] sm:$0xff]
  %v462 = vld [vmem:[%s6] sm:$0xff]
  %v463 = vld [vmem:[%s6 + $0x8] sm:$0xff]
  %v464 = vld [vmem:[%s6 + $0x10] sm:$0xff]
  %v465 = vld [vmem:[%s6 + $0x18] sm:$0xff]
  %v466 = vld [vmem:[%s6 + $0x20] sm:$0xff]
  %v467 = vld [vmem:[%s6 + $0x28] sm:$0xff]
  %v468 = vld [vmem:[%s6 + $0x30] sm:$0xff]
  %v469 = vld [vmem:[%s6 + $0x38] sm:$0xff]
  %v470 = vld [vmem:[%s6 + $0x40] sm:$0xff]
  %v471 = vld [vmem:[%s6 + $0x48] sm:$0xff]
  %v472 = vld [vmem:[%s6 + $0x50] sm:$0xff]
  %v473 = vld [vmem:[%s6 + $0x58] sm:$0xff]
  %v474 = vld [vmem:[%s6 + $0x60] sm:$0xff]
  %v475 = vld [vmem:[%s6 + $0x68] sm:$0xff]
  %v476 = vld [vmem:[%s6 + $0x70] sm:$0xff]
  %v477 = vld [vmem:[%s6 + $0x78] sm:$0xff]
  %v478 = vld [vmem:[%s6 + $0x80] sm:$0xff]
  %v479 = vld [vmem:[%s6 + $0x88] sm:$0xff]
  %v480 = vld [vmem:[%s6 + $0x90] sm:$0xff]
  %v481 = vld [vmem:[%s6 + $0x98] sm:$0xff]
  %v482 = vld [vmem:[%s6 + $0xa0] sm:$0xff]
  %v483 = vld [vmem:[%s6 + $0xa8] sm:$0xff]
  %v484 = vld [vmem:[%s6 + $0xb0] sm:$0xff]
  %v485 = vld [vmem:[%s6 + $0xb8] sm:$0xff]
  %v486 = vld [vmem:[%s6 + $0xc0] sm:$0xff]
  %v487 = vld [vmem:[%s6 + $0xc8] sm:$0xff]
  %v488 = vld [vmem:[%s6 + $0xd0] sm:$0xff]
  %v489 = vld [vmem:[%s6 + $0xd8] sm:$0xff]
  %v490 = vld [vmem:[%s6 + $0xe0] sm:$0xff]
  %v491 = vld [vmem:[%s6 + $0xe8] sm:$0xff]
  %v492 = vld [vmem:[%s6 + $0xf0] sm:$0xff]
  %v493 = vld [vmem:[%s6 + $0xf8] sm:$0xff]
  %v494 = vld [vmem:[%s6 + $0x100] sm:$0xff]
  %v495 = vld [vmem:[%s6 + $0x108] sm:$0xff]
  %v496 = vld [vmem:[%s6 + $0x110] sm:$0xff]
  %v497 = vld [vmem:[%s6 + $0x118] sm:$0xff]
  %v498 = vld [vmem:[%s6 + $0x120] sm:$0xff]
  %v499 = vld [vmem:[%s6 + $0x128] sm:$0xff]
  %v500 = vld [vmem:[%s6 + $0x130] sm:$0xff]
  %v501 = vld [vmem:[%s6 + $0x138] sm:$0xff]
  %v502 = vld [vmem:[%s6 + $0x140] sm:$0xff]
  %v503 = vld [vmem:[%s6 + $0x148] sm:$0xff]
  %v504 = vld [vmem:[%s6 + $0x150] sm:$0xff]
  %v505 = vld [vmem:[%s6 + $0x158] sm:$0xff]
  %v506 = vld [vmem:[%s6 + $0x160] sm:$0xff]
  %v507 = vld [vmem:[%s6 + $0x168] sm:$0xff]
  %v508 = vld [vmem:[%s6 + $0x170] sm:$0xff]
  %v509 = vld [vmem:[%s6 + $0x178] sm:$0xff]
  %v510 = vld [vmem:[%s6 + $0x180] sm:$0xff]
  %v511 = vld [vmem:[%s6 + $0x188] sm:$0xff]
  %v512 = vld [vmem:[%s6 + $0x190] sm:$0xff]
  %v513 = vld [vmem:[%s6 + $0x198] sm:$0xff]
  %v514 = vld [vmem:[%s6 + $0x1a0] sm:$0xff]
  %v515 = vld [vmem:[%s6 + $0x1a8] sm:$0xff]
  %v516 = vld [vmem:[%s6 + $0x1b0] sm:$0xff]
  %v517 = vld [vmem:[%s6 + $0x1b8] sm:$0xff]
  %v518 = vld [vmem:[%s6 + $0x1c0] sm:$0xff]
  %v519 = vld [vmem:[%s6 + $0x1c8] sm:$0xff]
  %v520 = vld [vmem:[%s6 + $0x1d0] sm:$0xff]
  %v521 = vld [vmem:[%s6 + $0x1d8] sm:$0xff]
  %v522 = vld [vmem:[%s6 + $0x1e0] sm:$0xff]
  %v523 = vld [vmem:[%s6 + $0x1e8] sm:$0xff]
  %v524 = vld [vmem:[%s6 + $0x1f0] sm:$0xff]
  %v525 = vld [vmem:[%s6 + $0x1f8] sm:$0xff]
  %v526 = vld [vmem:[%s6 + $0x200] sm:$0xff]
  %v527 = vld [vmem:[%s6 + $0x208] sm:$0xff]
  %v528 = vld [vmem:[%s6 + $0x210] sm:$0xff]
  %v529 = vld [vmem:[%s6 + $0x218] sm:$0xff]
  %v530 = vld [vmem:[%s6 + $0x220] sm:$0xff]
  %v531 = vld [vmem:[%s6 + $0x228] sm:$0xff]
  %v532 = vld [vmem:[%s6 + $0x230] sm:$0xff]
  %v533 = vld [vmem:[%s6 + $0x238] sm:$0xff]
  %v534 = vld [vmem:[%s6 + $0x240] sm:$0xff]
  %v535 = vld [vmem:[%s6 + $0x248] sm:$0xff]
  %v536 = vld [vmem:[%s6 + $0x250] sm:$0xff]
  %v537 = vld [vmem:[%s6 + $0x258] sm:$0xff]
  %v538 = vld [vmem:[%s6 + $0x260] sm:$0xff]
  %v539 = vld [vmem:[%s6 + $0x268] sm:$0xff]
  %v540 = vld [vmem:[%s6 + $0x270] sm:$0xff]
  %v541 = vld [vmem:[%s6 + $0x278] sm:$0xff]
  %v542 = vld [vmem:[%s6 + $0x280] sm:$0xff]
  %v543 = vld [vmem:[%s6 + $0x288] sm:$0xff]
  %v544 = vld [vmem:[%s6 + $0x290] sm:$0xff]
  %v545 = vld [vmem:[%s6 + $0x298] sm:$0xff]
  %v546 = vld [vmem:[%s6 + $0x2a0] sm:$0xff]
  %v547 = vld [vmem:[%s6 + $0x2a8] sm:$0xff]
  %v548 = vld [vmem:[%s6 + $0x2b0] sm:$0xff]
  %v549 = vld [vmem:[%s6 + $0x2b8] sm:$0xff]
  %v550 = vld [vmem:[%s6 + $0x2c0] sm:$0xff]
  %v551 = vld [vmem:[%s6 + $0x2c8] sm:$0xff]
  %v552 = vld [vmem:[%s6 + $0x2d0] sm:$0xff]
  %v553 = vld [vmem:[%s6 + $0x2d8] sm:$0xff]
  %v554 = vld [vmem:[%s6 + $0x2e0] sm:$0xff]
  %v555 = vld [vmem:[%s6 + $0x2e8] sm:$0xff]
  %v556 = vld [vmem:[%s6 + $0x2f0] sm:$0xff]
  %v557 = vld [vmem:[%s6 + $0x2f8] sm:$0xff]
  %v558 = vld [vmem:[%s6 + $0x300] sm:$0xff]
  %v559 = vld [vmem:[%s6 + $0x308] sm:$0xff]
  %v560 = vld [vmem:[%s6 + $0x310] sm:$0xff]
  %v561 = vld [vmem:[%s6 + $0x318] sm:$0xff]
  %v562 = vld [vmem:[%s6 + $0x320] sm:$0xff]
  %v563 = vld [vmem:[%s6 + $0x328] sm:$0xff]
  %v564 = vld [vmem:[%s6 + $0x330] sm:$0xff]
  %v565 = vld [vmem:[%s6 + $0x338] sm:$0xff]
  %v566 = vld [vmem:[%s6 + $0x340] sm:$0xff]
  %v567 = vld [vmem:[%s6 + $0x348] sm:$0xff]
  %v568 = vld [vmem:[%s6 + $0x350] sm:$0xff]
  %v569 = vld [vmem:[%s6 + $0x358] sm:$0xff]
  %v570 = vld [vmem:[%s6 + $0x360] sm:$0xff]
  %v571 = vld [vmem:[%s6 + $0x368] sm:$0xff]
  %v572 = vld [vmem:[%s6 + $0x370] sm:$0xff]
  %v573 = vld [vmem:[%s6 + $0x378] sm:$0xff]
  %v574 = vld [vmem:[%s6 + $0x380] sm:$0xff]
  %v575 = vld [vmem:[%s6 + $0x388] sm:$0xff]
  %v576 = vld [vmem:[%s6 + $0x390] sm:$0xff]
  %v577 = vld [vmem:[%s6 + $0x398] sm:$0xff]
  %v578 = vld [vmem:[%s6 + $0x3a0] sm:$0xff]
  %v579 = vld [vmem:[%s6 + $0x3a8] sm:$0xff]
  %v580 = vld [vmem:[%s6 + $0x3b0] sm:$0xff]
  %v581 = vld [vmem:[%s6 + $0x3b8] sm:$0xff]
  %v582 = vld [vmem:[%s6 + $0x3c0] sm:$0xff]
  %v583 = vld [vmem:[%s6 + $0x3c8] sm:$0xff]
  %v584 = vld [vmem:[%s6 + $0x3d0] sm:$0xff]
  %v585 = vld [vmem:[%s6 + $0x3d8] sm:$0xff]
  %v586 = vld [vmem:[%s6 + $0x3e0] sm:$0xff]
  %v587 = vld [vmem:[%s6 + $0x3e8] sm:$0xff]
  %v588 = vld [vmem:[%s6 + $0x3f0] sm:$0xff]
  %v589 = vld [vmem:[%s6 + $0x3f8] sm:$0xff]
  %v590 = vld [vmem:[%s6 + $0x400] sm:$0xff]
  %v591 = vld [vmem:[%s6 + $0x408] sm:$0xff]
  %v592 = vld [vmem:[%s6 + $0x410] sm:$0xff]
  %v593 = vld [vmem:[%s6 + $0x418] sm:$0xff]
  %v594 = vld [vmem:[%s6 + $0x420] sm:$0xff]
  %v595 = vld [vmem:[%s6 + $0x428] sm:$0xff]
  %v596 = vld [vmem:[%s6 + $0x430] sm:$0xff]
  %v597 = vld [vmem:[%s6 + $0x438] sm:$0xff]
  %v598 = vld [vmem:[%s6 + $0x440] sm:$0xff]
  %v599 = vld [vmem:[%s6 + $0x448] sm:$0xff]
  %v600 = vld [vmem:[%s6 + $0x450] sm:$0xff]
  %v601 = vld [vmem:[%s6 + $0x458] sm:$0xff]
  %v602 = vld [vmem:[%s6 + $0x460] sm:$0xff]
  %v603 = vld [vmem:[%s6 + $0x468] sm:$0xff]
  %v604 = vld [vmem:[%s6 + $0x470] sm:$0xff]
  %v605 = vld [vmem:[%s6 + $0x478] sm:$0xff]
  %v606 = vld [vmem:[%s6 + $0x480] sm:$0xff]
  %v607 = vld [vmem:[%s6 + $0x488] sm:$0xff]
  %v608 = vld [vmem:[%s6 + $0x490] sm:$0xff]
  %v609 = vld [vmem:[%s6 + $0x498] sm:$0xff]
  %v610 = vld [vmem:[%s6 + $0x4a0] sm:$0xff]
  %v611 = vld [vmem:[%s6 + $0x4a8] sm:$0xff]
  %v612 = vld [vmem:[%s6 + $0x4b0] sm:$0xff]
  %v613 = vld [vmem:[%s6 + $0x4b8] sm:$0xff]
  %v614 = vld [vmem:[%s6 + $0x4c0] sm:$0xff]
  %v615 = vld [vmem:[%s6 + $0x4c8] sm:$0xff]
  %v616 = vld [vmem:[%s6 + $0x4d0] sm:$0xff]
  %v617 = vld [vmem:[%s6 + $0x4d8] sm:$0xff]
  %v618 = vld [vmem:[%s6 + $0x4e0] sm:$0xff]
  %v619 = vld [vmem:[%s6 + $0x4e8] sm:$0xff]
  %v620 = vld [vmem:[%s6 + $0x4f0] sm:$0xff]
  %v621 = vld [vmem:[%s6 + $0x4f8] sm:$0xff]
  %v622 = vld [vmem:[%s6 + $0x500] sm:$0xff]
  %v623 = vld [vmem:[%s6 + $0x508] sm:$0xff]
  %v624 = vld [vmem:[%s6 + $0x510] sm:$0xff]
  %v625 = vld [vmem:[%s6 + $0x518] sm:$0xff]
  %v626 = vld [vmem:[%s6 + $0x520] sm:$0xff]
  %v627 = vld [vmem:[%s6 + $0x528] sm:$0xff]
  %v628 = vld [vmem:[%s6 + $0x530] sm:$0xff]
  %v629 = vld [vmem:[%s6 + $0x538] sm:$0xff]
  %v630 = vld [vmem:[%s6 + $0x540] sm:$0xff]
  %v631 = vld [vmem:[%s6 + $0x548] sm:$0xff]
  %v632 = vld [vmem:[%s6 + $0x550] sm:$0xff]
  %v633 = vld [vmem:[%s6 + $0x558] sm:$0xff]
  %v634 = vld [vmem:[%s6 + $0x560] sm:$0xff]
  %v635 = vld [vmem:[%s6 + $0x568] sm:$0xff]
  %v636 = vld [vmem:[%s6 + $0x570] sm:$0xff]
  %v637 = vld [vmem:[%s6 + $0x578] sm:$0xff]
  %v638 = vld [vmem:[%s6 + $0x580] sm:$0xff]
  %v639 = vld [vmem:[%s6 + $0x588] sm:$0xff]
  %v640 = vld [vmem:[%s6 + $0x590] sm:$0xff]
  %v641 = vld [vmem:[%s6 + $0x598] sm:$0xff]
  %v642 = vld [vmem:[%s6 + $0x5a0] sm:$0xff]
  %v643 = vld [vmem:[%s6 + $0x5a8] sm:$0xff]
  %v644 = vld [vmem:[%s6 + $0x5b0] sm:$0xff]
  %v645 = vld [vmem:[%s6 + $0x5b8] sm:$0xff]
  %v646 = vld [vmem:[%s6 + $0x5c0] sm:$0xff]
  %v647 = vld [vmem:[%s6 + $0x5c8] sm:$0xff]
  %v648 = vld [vmem:[%s6 + $0x5d0] sm:$0xff]
  %v649 = vld [vmem:[%s6 + $0x5d8] sm:$0xff]
  %v650 = vld [vmem:[%s6 + $0x5e0] sm:$0xff]
  %v651 = vld [vmem:[%s6 + $0x5e8] sm:$0xff]
  %v652 = vld [vmem:[%s6 + $0x5f0] sm:$0xff]
  %v653 = vld [vmem:[%s6 + $0x5f8] sm:$0xff]
  %v655 = vunpack.c.l.b16 %v461
  %v656 = vunpack.c.h.b16 %v461
  %v657 = vpack.c.b16 %v655, %v655
  %v658 = vpack.c.b16 %v656, %v656
  %v853 = vunpack.c.l.b16 %v462
  %v854 = vunpack.c.h.b16 %v462
  %v855 = vunpack.c.l.b16 %v463
  %v856 = vunpack.c.h.b16 %v463
  %v857 = vunpack.c.l.b16 %v464
  %v858 = vunpack.c.h.b16 %v464
  %v859 = vunpack.c.l.b16 %v465
  %v860 = vunpack.c.h.b16 %v465
  %v861 = vunpack.c.l.b16 %v466
  %v862 = vunpack.c.h.b16 %v466
  %v863 = vunpack.c.l.b16 %v467
  %v864 = vunpack.c.h.b16 %v467
  %v865 = vunpack.c.l.b16 %v468
  %v866 = vunpack.c.h.b16 %v468
  %v867 = vunpack.c.l.b16 %v469
  %v868 = vunpack.c.h.b16 %v469
  %v869 = vunpack.c.l.b16 %v470
  %v870 = vunpack.c.h.b16 %v470
  %v871 = vunpack.c.l.b16 %v471
  %v872 = vunpack.c.h.b16 %v471
  %v873 = vunpack.c.l.b16 %v472
  %v874 = vunpack.c.h.b16 %v472
  %v875 = vunpack.c.l.b16 %v473
  %v876 = vunpack.c.h.b16 %v473
  %v877 = vunpack.c.l.b16 %v474
  %v878 = vunpack.c.h.b16 %v474
  %v879 = vunpack.c.l.b16 %v475
  %v880 = vunpack.c.h.b16 %v475
  %v881 = vunpack.c.l.b16 %v476
  %v882 = vunpack.c.h.b16 %v476
  %v883 = vunpack.c.l.b16 %v477
  %v884 = vunpack.c.h.b16 %v477
  %v885 = vunpack.c.l.b16 %v478
  %v886 = vunpack.c.h.b16 %v478
  %v887 = vunpack.c.l.b16 %v479
  %v888 = vunpack.c.h.b16 %v479
  %v889 = vunpack.c.l.b16 %v480
  %v890 = vunpack.c.h.b16 %v480
  %v891 = vunpack.c.l.b16 %v481
  %v892 = vunpack.c.h.b16 %v481
  %v893 = vunpack.c.l.b16 %v482
  %v894 = vunpack.c.h.b16 %v482
  %v895 = vunpack.c.l.b16 %v483
  %v896 = vunpack.c.h.b16 %v483
  %v897 = vunpack.c.l.b16 %v484
  %v898 = vunpack.c.h.b16 %v484
  %v899 = vunpack.c.l.b16 %v485
  %v900 = vunpack.c.h.b16 %v485
  %v901 = vunpack.c.l.b16 %v486
  %v902 = vunpack.c.h.b16 %v486
  %v903 = vunpack.c.l.b16 %v487
  %v904 = vunpack.c.h.b16 %v487
  %v905 = vunpack.c.l.b16 %v488
  %v906 = vunpack.c.h.b16 %v488
  %v907 = vunpack.c.l.b16 %v489
  %v908 = vunpack.c.h.b16 %v489
  %v909 = vunpack.c.l.b16 %v490
  %v910 = vunpack.c.h.b16 %v490
  %v911 = vunpack.c.l.b16 %v491
  %v912 = vunpack.c.h.b16 %v491
  %v913 = vunpack.c.l.b16 %v492
  %v914 = vunpack.c.h.b16 %v492
  %v915 = vunpack.c.l.b16 %v493
  %v916 = vunpack.c.h.b16 %v493
  %v917 = vunpack.c.l.b16 %v494
  %v918 = vunpack.c.h.b16 %v494
  %v919 = vunpack.c.l.b16 %v495
  %v920 = vunpack.c.h.b16 %v495
  %v921 = vunpack.c.l.b16 %v496
  %v922 = vunpack.c.h.b16 %v496
  %v923 = vunpack.c.l.b16 %v497
  %v924 = vunpack.c.h.b16 %v497
  %v925 = vunpack.c.l.b16 %v498
  %v926 = vunpack.c.h.b16 %v498
  %v927 = vunpack.c.l.b16 %v499
  %v928 = vunpack.c.h.b16 %v499
  %v929 = vunpack.c.l.b16 %v500
  %v930 = vunpack.c.h.b16 %v500
  %v931 = vunpack.c.l.b16 %v501
  %v932 = vunpack.c.h.b16 %v501
  %v933 = vunpack.c.l.b16 %v502
  %v934 = vunpack.c.h.b16 %v502
  %v935 = vunpack.c.l.b16 %v503
  %v936 = vunpack.c.h.b16 %v503
  %v937 = vunpack.c.l.b16 %v504
  %v938 = vunpack.c.h.b16 %v504
  %v939 = vunpack.c.l.b16 %v505
  %v940 = vunpack.c.h.b16 %v505
  %v941 = vunpack.c.l.b16 %v506
  %v942 = vunpack.c.h.b16 %v506
  %v943 = vunpack.c.l.b16 %v507
  %v944 = vunpack.c.h.b16 %v507
  %v945 = vunpack.c.l.b16 %v508
  %v946 = vunpack.c.h.b16 %v508
  %v947 = vunpack.c.l.b16 %v509
  %v948 = vunpack.c.h.b16 %v509
  %v949 = vunpack.c.l.b16 %v510
  %v950 = vunpack.c.h.b16 %v510
  %v951 = vunpack.c.l.b16 %v511
  %v952 = vunpack.c.h.b16 %v511
  %v953 = vunpack.c.l.b16 %v512
  %v954 = vunpack.c.h.b16 %v512
  %v955 = vunpack.c.l.b16 %v513
  %v956 = vunpack.c.h.b16 %v513
  %v957 = vunpack.c.l.b16 %v514
  %v958 = vunpack.c.h.b16 %v514
  %v959 = vunpack.c.l.b16 %v515
  %v960 = vunpack.c.h.b16 %v515
  %v961 = vunpack.c.l.b16 %v516
  %v962 = vunpack.c.h.b16 %v516
  %v963 = vunpack.c.l.b16 %v517
  %v964 = vunpack.c.h.b16 %v517
  %v965 = vunpack.c.l.b16 %v518
  %v966 = vunpack.c.h.b16 %v518
  %v967 = vunpack.c.l.b16 %v519
  %v968 = vunpack.c.h.b16 %v519
  %v969 = vunpack.c.l.b16 %v520
  %v970 = vunpack.c.h.b16 %v520
  %v971 = vunpack.c.l.b16 %v521
  %v972 = vunpack.c.h.b16 %v521
  %v973 = vunpack.c.l.b16 %v522
  %v974 = vunpack.c.h.b16 %v522
  %v975 = vunpack.c.l.b16 %v523
  %v976 = vunpack.c.h.b16 %v523
  %v977 = vunpack.c.l.b16 %v524
  %v978 = vunpack.c.h.b16 %v524
  %v979 = vunpack.c.l.b16 %v525
  %v980 = vunpack.c.h.b16 %v525
  %v981 = vunpack.c.l.b16 %v526
  %v982 = vunpack.c.h.b16 %v526
  %v983 = vunpack.c.l.b16 %v527
  %v984 = vunpack.c.h.b16 %v527
  %v985 = vunpack.c.l.b16 %v528
  %v986 = vunpack.c.h.b16 %v528
  %v987 = vunpack.c.l.b16 %v529
  %v988 = vunpack.c.h.b16 %v529
  %v989 = vunpack.c.l.b16 %v530
  %v990 = vunpack.c.h.b16 %v530
  %v991 = vunpack.c.l.b16 %v531
  %v992 = vunpack.c.h.b16 %v531
  %v993 = vunpack.c.l.b16 %v532
  %v994 = vunpack.c.h.b16 %v532
  %v995 = vunpack.c.l.b16 %v533
  %v996 = vunpack.c.h.b16 %v533
  %v997 = vunpack.c.l.b16 %v534
  %v998 = vunpack.c.h.b16 %v534
  %v999 = vunpack.c.l.b16 %v535
  %v1000 = vunpack.c.h.b16 %v535
  %v1001 = vunpack.c.l.b16 %v536
  %v1002 = vunpack.c.h.b16 %v536
  %v1003 = vunpack.c.l.b16 %v537
  %v1004 = vunpack.c.h.b16 %v537
  %v1005 = vunpack.c.l.b16 %v538
  %v1006 = vunpack.c.h.b16 %v538
  %v1007 = vunpack.c.l.b16 %v539
  %v1008 = vunpack.c.h.b16 %v539
  %v1009 = vunpack.c.l.b16 %v540
  %v1010 = vunpack.c.h.b16 %v540
  %v1011 = vunpack.c.l.b16 %v541
  %v1012 = vunpack.c.h.b16 %v541
  %v1013 = vunpack.c.l.b16 %v542
  %v1014 = vunpack.c.h.b16 %v542
  %v1015 = vunpack.c.l.b16 %v543
  %v1016 = vunpack.c.h.b16 %v543
  %v1017 = vunpack.c.l.b16 %v544
  %v1018 = vunpack.c.h.b16 %v544
  %v1019 = vunpack.c.l.b16 %v545
  %v1020 = vunpack.c.h.b16 %v545
  %v1021 = vunpack.c.l.b16 %v546
  %v1022 = vunpack.c.h.b16 %v546
  %v1023 = vunpack.c.l.b16 %v547
  %v1024 = vunpack.c.h.b16 %v547
  %v1025 = vunpack.c.l.b16 %v548
  %v1026 = vunpack.c.h.b16 %v548
  %v1027 = vunpack.c.l.b16 %v549
  %v1028 = vunpack.c.h.b16 %v549
  %v1029 = vunpack.c.l.b16 %v550
  %v1030 = vunpack.c.h.b16 %v550
  %v1031 = vunpack.c.l.b16 %v551
  %v1032 = vunpack.c.h.b16 %v551
  %v1033 = vunpack.c.l.b16 %v552
  %v1034 = vunpack.c.h.b16 %v552
  %v1035 = vunpack.c.l.b16 %v553
  %v1036 = vunpack.c.h.b16 %v553
  %v1037 = vunpack.c.l.b16 %v554
  %v1038 = vunpack.c.h.b16 %v554
  %v1039 = vunpack.c.l.b16 %v555
  %v1040 = vunpack.c.h.b16 %v555
  %v1041 = vunpack.c.l.b16 %v556
  %v1042 = vunpack.c.h.b16 %v556
  %v1043 = vunpack.c.l.b16 %v557
  %v1044 = vunpack.c.h.b16 %v557
  %v1045 = vunpack.c.l.b16 %v558
  %v1046 = vunpack.c.h.b16 %v558
  %v1047 = vunpack.c.l.b16 %v559
  %v1048 = vunpack.c.h.b16 %v559
  %v1049 = vunpack.c.l.b16 %v560
  %v1050 = vunpack.c.h.b16 %v560
  %v1051 = vunpack.c.l.b16 %v561
  %v1052 = vunpack.c.h.b16 %v561
  %v1053 = vunpack.c.l.b16 %v562
  %v1054 = vunpack.c.h.b16 %v562
  %v1055 = vunpack.c.l.b16 %v563
  %v1056 = vunpack.c.h.b16 %v563
  %v1057 = vunpack.c.l.b16 %v564
  %v1058 = vunpack.c.h.b16 %v564
  %v1059 = vunpack.c.l.b16 %v565
  %v1060 = vunpack.c.h.b16 %v565
  %v1061 = vunpack.c.l.b16 %v566
  %v1062 = vunpack.c.h.b16 %v566
  %v1063 = vunpack.c.l.b16 %v567
  %v1064 = vunpack.c.h.b16 %v567
  %v1065 = vunpack.c.l.b16 %v568
  %v1066 = vunpack.c.h.b16 %v568
  %v1067 = vunpack.c.l.b16 %v569
  %v1068 = vunpack.c.h.b16 %v569
  %v1069 = vunpack.c.l.b16 %v570
  %v1070 = vunpack.c.h.b16 %v570
  %v1071 = vunpack.c.l.b16 %v571
  %v1072 = vunpack.c.h.b16 %v571
  %v1073 = vunpack.c.l.b16 %v572
  %v1074 = vunpack.c.h.b16 %v572
  %v1075 = vunpack.c.l.b16 %v573
  %v1076 = vunpack.c.h.b16 %v573
  %v1077 = vunpack.c.l.b16 %v574
  %v1078 = vunpack.c.h.b16 %v574
  %v1079 = vunpack.c.l.b16 %v575
  %v1080 = vunpack.c.h.b16 %v575
  %v1081 = vunpack.c.l.b16 %v576
  %v1082 = vunpack.c.h.b16 %v576
  %v1083 = vunpack.c.l.b16 %v577
  %v1084 = vunpack.c.h.b16 %v577
  %v1085 = vunpack.c.l.b16 %v578
  %v1086 = vunpack.c.h.b16 %v578
  %v1087 = vunpack.c.l.b16 %v579
  %v1088 = vunpack.c.h.b16 %v579
  %v1089 = vunpack.c.l.b16 %v580
  %v1090 = vunpack.c.h.b16 %v580
  %v1091 = vunpack.c.l.b16 %v581
  %v1092 = vunpack.c.h.b16 %v581
  %v1093 = vunpack.c.l.b16 %v582
  %v1094 = vunpack.c.h.b16 %v582
  %v1095 = vunpack.c.l.b16 %v583
  %v1096 = vunpack.c.h.b16 %v583
  %v1097 = vunpack.c.l.b16 %v584
  %v1098 = vunpack.c.h.b16 %v584
  %v1099 = vunpack.c.l.b16 %v585
  %v1100 = vunpack.c.h.b16 %v585
  %v1101 = vunpack.c.l.b16 %v586
  %v1102 = vunpack.c.h.b16 %v586
  %v1103 = vunpack.c.l.b16 %v587
  %v1104 = vunpack.c.h.b16 %v587
  %v1105 = vunpack.c.l.b16 %v588
  %v1106 = vunpack.c.h.b16 %v588
  %v1107 = vunpack.c.l.b16 %v589
  %v1108 = vunpack.c.h.b16 %v589
  %v1109 = vunpack.c.l.b16 %v590
  %v1110 = vunpack.c.h.b16 %v590
  %v1111 = vunpack.c.l.b16 %v591
  %v1112 = vunpack.c.h.b16 %v591
  %v1113 = vunpack.c.l.b16 %v592
  %v1114 = vunpack.c.h.b16 %v592
  %v1115 = vunpack.c.l.b16 %v593
  %v1116 = vunpack.c.h.b16 %v593
  %v1117 = vunpack.c.l.b16 %v594
  %v1118 = vunpack.c.h.b16 %v594
  %v1119 = vunpack.c.l.b16 %v595
  %v1120 = vunpack.c.h.b16 %v595
  %v1121 = vunpack.c.l.b16 %v596
  %v1122 = vunpack.c.h.b16 %v596
  %v1123 = vunpack.c.l.b16 %v597
  %v1124 = vunpack.c.h.b16 %v597
  %v1125 = vunpack.c.l.b16 %v598
  %v1126 = vunpack.c.h.b16 %v598
  %v1127 = vunpack.c.l.b16 %v599
  %v1128 = vunpack.c.h.b16 %v599
  %v1129 = vunpack.c.l.b16 %v600
  %v1130 = vunpack.c.h.b16 %v600
  %v1131 = vunpack.c.l.b16 %v601
  %v1132 = vunpack.c.h.b16 %v601
  %v1133 = vunpack.c.l.b16 %v602
  %v1134 = vunpack.c.h.b16 %v602
  %v1135 = vunpack.c.l.b16 %v603
  %v1136 = vunpack.c.h.b16 %v603
  %v1137 = vunpack.c.l.b16 %v604
  %v1138 = vunpack.c.h.b16 %v604
  %v1139 = vunpack.c.l.b16 %v605
  %v1140 = vunpack.c.h.b16 %v605
  %v1141 = vunpack.c.l.b16 %v606
  %v1142 = vunpack.c.h.b16 %v606
  %v1143 = vunpack.c.l.b16 %v607
  %v1144 = vunpack.c.h.b16 %v607
  %v1145 = vunpack.c.l.b16 %v608
  %v1146 = vunpack.c.h.b16 %v608
  %v1147 = vunpack.c.l.b16 %v609
  %v1148 = vunpack.c.h.b16 %v609
  %v1149 = vunpack.c.l.b16 %v610
  %v1150 = vunpack.c.h.b16 %v610
  %v1151 = vunpack.c.l.b16 %v611
  %v1152 = vunpack.c.h.b16 %v611
  %v1153 = vunpack.c.l.b16 %v612
  %v1154 = vunpack.c.h.b16 %v612
  %v1155 = vunpack.c.l.b16 %v613
  %v1156 = vunpack.c.h.b16 %v613
  %v1157 = vunpack.c.l.b16 %v614
  %v1158 = vunpack.c.h.b16 %v614
  %v1159 = vunpack.c.l.b16 %v615
  %v1160 = vunpack.c.h.b16 %v615
  %v1161 = vunpack.c.l.b16 %v616
  %v1162 = vunpack.c.h.b16 %v616
  %v1163 = vunpack.c.l.b16 %v617
  %v1164 = vunpack.c.h.b16 %v617
  %v1165 = vunpack.c.l.b16 %v618
  %v1166 = vunpack.c.h.b16 %v618
  %v1167 = vunpack.c.l.b16 %v619
  %v1168 = vunpack.c.h.b16 %v619
  %v1169 = vunpack.c.l.b16 %v620
  %v1170 = vunpack.c.h.b16 %v620
  %v1171 = vunpack.c.l.b16 %v621
  %v1172 = vunpack.c.h.b16 %v621
  %v1173 = vunpack.c.l.b16 %v622
  %v1174 = vunpack.c.h.b16 %v622
  %v1175 = vunpack.c.l.b16 %v623
  %v1176 = vunpack.c.h.b16 %v623
  %v1177 = vunpack.c.l.b16 %v624
  %v1178 = vunpack.c.h.b16 %v624
  %v1179 = vunpack.c.l.b16 %v625
  %v1180 = vunpack.c.h.b16 %v625
  %v1181 = vunpack.c.l.b16 %v626
  %v1182 = vunpack.c.h.b16 %v626
  %v1183 = vunpack.c.l.b16 %v627
  %v1184 = vunpack.c.h.b16 %v627
  %v1185 = vunpack.c.l.b16 %v628
  %v1186 = vunpack.c.h.b16 %v628
  %v1187 = vunpack.c.l.b16 %v629
  %v1188 = vunpack.c.h.b16 %v629
  %v1189 = vunpack.c.l.b16 %v630
  %v1190 = vunpack.c.h.b16 %v630
  %v1191 = vunpack.c.l.b16 %v631
  %v1192 = vunpack.c.h.b16 %v631
  %v1193 = vunpack.c.l.b16 %v632
  %v1194 = vunpack.c.h.b16 %v632
  %v1195 = vunpack.c.l.b16 %v633
  %v1196 = vunpack.c.h.b16 %v633
  %v1197 = vunpack.c.l.b16 %v634
  %v1198 = vunpack.c.h.b16 %v634
  %v1199 = vunpack.c.l.b16 %v635
  %v1200 = vunpack.c.h.b16 %v635
  %v1201 = vunpack.c.l.b16 %v636
  %v1202 = vunpack.c.h.b16 %v636
  %v1203 = vunpack.c.l.b16 %v637
  %v1204 = vunpack.c.h.b16 %v637
  %v1205 = vunpack.c.l.b16 %v638
  %v1206 = vunpack.c.h.b16 %v638
  %v1207 = vunpack.c.l.b16 %v639
  %v1208 = vunpack.c.h.b16 %v639
  %v1209 = vunpack.c.l.b16 %v640
  %v1210 = vunpack.c.h.b16 %v640
  %v1211 = vunpack.c.l.b16 %v641
  %v1212 = vunpack.c.h.b16 %v641
  %v1213 = vunpack.c.l.b16 %v642
  %v1214 = vunpack.c.h.b16 %v642
  %v1215 = vunpack.c.l.b16 %v643
  %v1216 = vunpack.c.h.b16 %v643
  %v1217 = vunpack.c.l.b16 %v644
  %v1218 = vunpack.c.h.b16 %v644
  %v1219 = vunpack.c.l.b16 %v645
  %v1220 = vunpack.c.h.b16 %v645
  %v1221 = vunpack.c.l.b16 %v646
  %v1222 = vunpack.c.h.b16 %v646
  %v1223 = vunpack.c.l.b16 %v647
  %v1224 = vunpack.c.h.b16 %v647
  %v1225 = vunpack.c.l.b16 %v648
  %v1226 = vunpack.c.h.b16 %v648
  %v1227 = vunpack.c.l.b16 %v649
  %v1228 = vunpack.c.h.b16 %v649
  %v1229 = vunpack.c.l.b16 %v650
  %v1230 = vunpack.c.h.b16 %v650
  %v1231 = vunpack.c.l.b16 %v651
  %v1232 = vunpack.c.h.b16 %v651
  %v1233 = vunpack.c.l.b16 %v652
  %v1234 = vunpack.c.h.b16 %v652
  %v1235 = vunpack.c.l.b16 %v653
  %v1236 = vunpack.c.h.b16 %v653
  %v1237 = vpack.c.b16 %v865, %v853
  %v1238 = vpack.c.b16 %v866, %v854
  %v1239 = vpack.c.b16 %v867, %v855
  %v1240 = vpack.c.b16 %v868, %v856
  %v1241 = vpack.c.b16 %v869, %v857
  %v1242 = vpack.c.b16 %v870, %v858
  %v1243 = vpack.c.b16 %v871, %v859
  %v1244 = vpack.c.b16 %v872, %v860
  %v1245 = vpack.c.b16 %v873, %v861
  %v1246 = vpack.c.b16 %v874, %v862
  %v1247 = vpack.c.b16 %v875, %v863
  %v1248 = vpack.c.b16 %v876, %v864
  %v1249 = vpack.c.b16 %v889, %v877
  %v1250 = vpack.c.b16 %v890, %v878
  %v1251 = vpack.c.b16 %v891, %v879
  %v1252 = vpack.c.b16 %v892, %v880
  %v1253 = vpack.c.b16 %v893, %v881
  %v1254 = vpack.c.b16 %v894, %v882
  %v1255 = vpack.c.b16 %v895, %v883
  %v1256 = vpack.c.b16 %v896, %v884
  %v1257 = vpack.c.b16 %v897, %v885
  %v1258 = vpack.c.b16 %v898, %v886
  %v1259 = vpack.c.b16 %v899, %v887
  %v1260 = vpack.c.b16 %v900, %v888
  %v1261 = vpack.c.b16 %v913, %v901
  %v1262 = vpack.c.b16 %v914, %v902
  %v1263 = vpack.c.b16 %v915, %v903
  %v1264 = vpack.c.b16 %v916, %v904
  %v1265 = vpack.c.b16 %v917, %v905
  %v1266 = vpack.c.b16 %v918, %v906
  %v1267 = vpack.c.b16 %v919, %v907
  %v1268 = vpack.c.b16 %v920, %v908
  %v1269 = vpack.c.b16 %v921, %v909
  %v1270 = vpack.c.b16 %v922, %v910
  %v1271 = vpack.c.b16 %v923, %v911
  %v1272 = vpack.c.b16 %v924, %v912
  %v1273 = vpack.c.b16 %v937, %v925
  %v1274 = vpack.c.b16 %v938, %v926
  %v1275 = vpack.c.b16 %v939, %v927
  %v1276 = vpack.c.b16 %v940, %v928
  %v1277 = vpack.c.b16 %v941, %v929
  %v1278 = vpack.c.b16 %v942, %v930
  %v1279 = vpack.c.b16 %v943, %v931
  %v1280 = vpack.c.b16 %v944, %v932
  %v1281 = vpack.c.b16 %v945, %v933
  %v1282 = vpack.c.b16 %v946, %v934
  %v1283 = vpack.c.b16 %v947, %v935
  %v1284 = vpack.c.b16 %v948, %v936
  %v1285 = vpack.c.b16 %v961, %v949
  %v1286 = vpack.c.b16 %v962, %v950
  %v1287 = vpack.c.b16 %v963, %v951
  %v1288 = vpack.c.b16 %v964, %v952
  %v1289 = vpack.c.b16 %v965, %v953
  %v1290 = vpack.c.b16 %v966, %v954
  %v1291 = vpack.c.b16 %v967, %v955
  %v1292 = vpack.c.b16 %v968, %v956
  %v1293 = vpack.c.b16 %v969, %v957
  %v1294 = vpack.c.b16 %v970, %v958
  %v1295 = vpack.c.b16 %v971, %v959
  %v1296 = vpack.c.b16 %v972, %v960
  %v1297 = vpack.c.b16 %v985, %v973
  %v1298 = vpack.c.b16 %v986, %v974
  %v1299 = vpack.c.b16 %v987, %v975
  %v1300 = vpack.c.b16 %v988, %v976
  %v1301 = vpack.c.b16 %v989, %v977
  %v1302 = vpack.c.b16 %v990, %v978
  %v1303 = vpack.c.b16 %v991, %v979
  %v1304 = vpack.c.b16 %v992, %v980
  %v1305 = vpack.c.b16 %v993, %v981
  %v1306 = vpack.c.b16 %v994, %v982
  %v1307 = vpack.c.b16 %v995, %v983
  %v1308 = vpack.c.b16 %v996, %v984
  %v1309 = vpack.c.b16 %v1009, %v997
  %v1310 = vpack.c.b16 %v1010, %v998
  %v1311 = vpack.c.b16 %v1011, %v999
  %v1312 = vpack.c.b16 %v1012, %v1000
  %v1313 = vpack.c.b16 %v1013, %v1001
  %v1314 = vpack.c.b16 %v1014, %v1002
  %v1315 = vpack.c.b16 %v1015, %v1003
  %v1316 = vpack.c.b16 %v1016, %v1004
  %v1317 = vpack.c.b16 %v1017, %v1005
  %v1318 = vpack.c.b16 %v1018, %v1006
  %v1319 = vpack.c.b16 %v1019, %v1007
  %v1320 = vpack.c.b16 %v1020, %v1008
  %v1321 = vpack.c.b16 %v1033, %v1021
  %v1322 = vpack.c.b16 %v1034, %v1022
  %v1323 = vpack.c.b16 %v1035, %v1023
  %v1324 = vpack.c.b16 %v1036, %v1024
  %v1325 = vpack.c.b16 %v1037, %v1025
  %v1326 = vpack.c.b16 %v1038, %v1026
  %v1327 = vpack.c.b16 %v1039, %v1027
  %v1328 = vpack.c.b16 %v1040, %v1028
  %v1329 = vpack.c.b16 %v1041, %v1029
  %v1330 = vpack.c.b16 %v1042, %v1030
  %v1331 = vpack.c.b16 %v1043, %v1031
  %v1332 = vpack.c.b16 %v1044, %v1032
  %v1333 = vpack.c.b16 %v1057, %v1045
  %v1334 = vpack.c.b16 %v1058, %v1046
  %v1335 = vpack.c.b16 %v1059, %v1047
  %v1336 = vpack.c.b16 %v1060, %v1048
  %v1337 = vpack.c.b16 %v1061, %v1049
  %v1338 = vpack.c.b16 %v1062, %v1050
  %v1339 = vpack.c.b16 %v1063, %v1051
  %v1340 = vpack.c.b16 %v1064, %v1052
  %v1341 = vpack.c.b16 %v1065, %v1053
  %v1342 = vpack.c.b16 %v1066, %v1054
  %v1343 = vpack.c.b16 %v1067, %v1055
  %v1344 = vpack.c.b16 %v1068, %v1056
  %v1345 = vpack.c.b16 %v1081, %v1069
  %v1346 = vpack.c.b16 %v1082, %v1070
  %v1347 = vpack.c.b16 %v1083, %v1071
  %v1348 = vpack.c.b16 %v1084, %v1072
  %v1349 = vpack.c.b16 %v1085, %v1073
  %v1350 = vpack.c.b16 %v1086, %v1074
  %v1351 = vpack.c.b16 %v1087, %v1075
  %v1352 = vpack.c.b16 %v1088, %v1076
  %v1353 = vpack.c.b16 %v1089, %v1077
  %v1354 = vpack.c.b16 %v1090, %v1078
  %v1355 = vpack.c.b16 %v1091, %v1079
  %v1356 = vpack.c.b16 %v1092, %v1080
  %v1357 = vpack.c.b16 %v1105, %v1093
  %v1358 = vpack.c.b16 %v1106, %v1094
  %v1359 = vpack.c.b16 %v1107, %v1095
  %v1360 = vpack.c.b16 %v1108, %v1096
  %v1361 = vpack.c.b16 %v1109, %v1097
  %v1362 = vpack.c.b16 %v1110, %v1098
  %v1363 = vpack.c.b16 %v1111, %v1099
  %v1364 = vpack.c.b16 %v1112, %v1100
  %v1365 = vpack.c.b16 %v1113, %v1101
  %v1366 = vpack.c.b16 %v1114, %v1102
  %v1367 = vpack.c.b16 %v1115, %v1103
  %v1368 = vpack.c.b16 %v1116, %v1104
  %v1369 = vpack.c.b16 %v1129, %v1117
  %v1370 = vpack.c.b16 %v1130, %v1118
  %v1371 = vpack.c.b16 %v1131, %v1119
  %v1372 = vpack.c.b16 %v1132, %v1120
  %v1373 = vpack.c.b16 %v1133, %v1121
  %v1374 = vpack.c.b16 %v1134, %v1122
  %v1375 = vpack.c.b16 %v1135, %v1123
  %v1376 = vpack.c.b16 %v1136, %v1124
  %v1377 = vpack.c.b16 %v1137, %v1125
  %v1378 = vpack.c.b16 %v1138, %v1126
  %v1379 = vpack.c.b16 %v1139, %v1127
  %v1380 = vpack.c.b16 %v1140, %v1128
  %v1381 = vpack.c.b16 %v1153, %v1141
  %v1382 = vpack.c.b16 %v1154, %v1142
  %v1383 = vpack.c.b16 %v1155, %v1143
  %v1384 = vpack.c.b16 %v1156, %v1144
  %v1385 = vpack.c.b16 %v1157, %v1145
  %v1386 = vpack.c.b16 %v1158, %v1146
  %v1387 = vpack.c.b16 %v1159, %v1147
  %v1388 = vpack.c.b16 %v1160, %v1148
  %v1389 = vpack.c.b16 %v1161, %v1149
  %v1390 = vpack.c.b16 %v1162, %v1150
  %v1391 = vpack.c.b16 %v1163, %v1151
  %v1392 = vpack.c.b16 %v1164, %v1152
  %v1393 = vpack.c.b16 %v1177, %v1165
  %v1394 = vpack.c.b16 %v1178, %v1166
  %v1395 = vpack.c.b16 %v1179, %v1167
  %v1396 = vpack.c.b16 %v1180, %v1168
  %v1397 = vpack.c.b16 %v1181, %v1169
  %v1398 = vpack.c.b16 %v1182, %v1170
  %v1399 = vpack.c.b16 %v1183, %v1171
  %v1400 = vpack.c.b16 %v1184, %v1172
  %v1401 = vpack.c.b16 %v1185, %v1173
  %v1402 = vpack.c.b16 %v1186, %v1174
  %v1403 = vpack.c.b16 %v1187, %v1175
  %v1404 = vpack.c.b16 %v1188, %v1176
  %v1405 = vpack.c.b16 %v1201, %v1189
  %v1406 = vpack.c.b16 %v1202, %v1190
  %v1407 = vpack.c.b16 %v1203, %v1191
  %v1408 = vpack.c.b16 %v1204, %v1192
  %v1409 = vpack.c.b16 %v1205, %v1193
  %v1410 = vpack.c.b16 %v1206, %v1194
  %v1411 = vpack.c.b16 %v1207, %v1195
  %v1412 = vpack.c.b16 %v1208, %v1196
  %v1413 = vpack.c.b16 %v1209, %v1197
  %v1414 = vpack.c.b16 %v1210, %v1198
  %v1415 = vpack.c.b16 %v1211, %v1199
  %v1416 = vpack.c.b16 %v1212, %v1200
  %v1417 = vpack.c.b16 %v1225, %v1213
  %v1418 = vpack.c.b16 %v1226, %v1214
  %v1419 = vpack.c.b16 %v1227, %v1215
  %v1420 = vpack.c.b16 %v1228, %v1216
  %v1421 = vpack.c.b16 %v1229, %v1217
  %v1422 = vpack.c.b16 %v1230, %v1218
  %v1423 = vpack.c.b16 %v1231, %v1219
  %v1424 = vpack.c.b16 %v1232, %v1220
  %v1425 = vpack.c.b16 %v1233, %v1221
  %v1426 = vpack.c.b16 %v1234, %v1222
  %v1427 = vpack.c.b16 %v1235, %v1223
  %v1428 = vpack.c.b16 %v1236, %v1224
  %1621 = vmatprep.subr.bf16.mxu0 %v1238
  %1622 = vmatpush1.bf16.msra.mxu0 %v1237
  %1623 = vmatprep.subr.bf16.mxu0 %v1250
  %1624 = vmatpush1.bf16.msra.mxu0 %v1249
  %1625 = vmatprep.subr.bf16.mxu0 %v1262
  %1626 = vmatpush1.bf16.msra.mxu0 %v1261
  %1627 = vmatprep.subr.bf16.mxu0 %v1274
  %1628 = vmatpush1.bf16.msra.mxu0 %v1273
  %1629 = vmatprep.subr.bf16.mxu0 %v1286
  %1630 = vmatpush1.bf16.msra.mxu0 %v1285
  %1631 = vmatprep.subr.bf16.mxu0 %v1298
  %1632 = vmatpush1.bf16.msra.mxu0 %v1297
  %1633 = vmatprep.subr.bf16.mxu0 %v1310
  %1634 = vmatpush1.bf16.msra.mxu0 %v1309
  %1635 = vmatprep.subr.bf16.mxu0 %v1322
  %1636 = vmatpush1.bf16.msra.mxu0 %v1321
  %1637 = vmatprep.subr.bf16.mxu0 %v1334
  %1638 = vmatpush1.bf16.msra.mxu0 %v1333
  %1639 = vmatprep.subr.bf16.mxu0 %v1346
  %1640 = vmatpush1.bf16.msra.mxu0 %v1345
  %1641 = vmatprep.subr.bf16.mxu0 %v1358
  %1642 = vmatpush1.bf16.msra.mxu0 %v1357
  %1643 = vmatprep.subr.bf16.mxu0 %v1370
  %1644 = vmatpush1.bf16.msra.mxu0 %v1369
  %1645 = vmatprep.subr.bf16.mxu0 %v1382
  %1646 = vmatpush1.bf16.msra.mxu0 %v1381
  %1647 = vmatprep.subr.bf16.mxu0 %v1394
  %1648 = vmatpush1.bf16.msra.mxu0 %v1393
  %1649 = vmatprep.subr.bf16.mxu0 %v1406
  %1650 = vmatpush1.bf16.msra.mxu0 %v1405
  %1651 = vmatprep.subr.bf16.mxu0 %v1418
  %1652 = vmatpush1.bf16.msra.mxu0 %v1417
  %1653 = vmatprep.mubr.bf16.mxu0 %v658
  %1654 = vmatmul.mubr.bf16.gmra.mrb[0].mxu0 %v657
  %v1655 = vpop.f32.mrb[0].mxu0
  %v1656 = vadd.f32 0.0, %v1655
  %v1657 = vpop.f32.mrb[0].mxu0
  %v1658 = vadd.f32 0.0, %v1657
  %v1659 = vpop.f32.mrb[0].mxu0
  %v1660 = vpop.f32.mrb[0].mxu0
  %1661 = vdwg.mxu0
  %1662 = vmatprep.subr.bf16.mxu0 %v1240
  %1663 = vmatpush1.bf16.msra.mxu0 %v1239
  %1664 = vmatprep.subr.bf16.mxu0 %v1252
  %1665 = vmatpush1.bf16.msra.mxu0 %v1251
  %1666 = vmatprep.subr.bf16.mxu0 %v1264
  %1667 = vmatpush1.bf16.msra.mxu0 %v1263
  %1668 = vmatprep.subr.bf16.mxu0 %v1276
  %1669 = vmatpush1.bf16.msra.mxu0 %v1275
  %1670 = vmatprep.subr.bf16.mxu0 %v1288
  %1671 = vmatpush1.bf16.msra.mxu0 %v1287
  %1672 = vmatprep.subr.bf16.mxu0 %v1300
  %1673 = vmatpush1.bf16.msra.mxu0 %v1299
  %1674 = vmatprep.subr.bf16.mxu0 %v1312
  %1675 = vmatpush1.bf16.msra.mxu0 %v1311
  %1676 = vmatprep.subr.bf16.mxu0 %v1324
  %1677 = vmatpush1.bf16.msra.mxu0 %v1323
  %1678 = vmatprep.subr.bf16.mxu0 %v1336
  %1679 = vmatpush1.bf16.msra.mxu0 %v1335
  %1680 = vmatprep.subr.bf16.mxu0 %v1348
  %1681 = vmatpush1.bf16.msra.mxu0 %v1347
  %1682 = vmatprep.subr.bf16.mxu0 %v1360
  %1683 = vmatpush1.bf16.msra.mxu0 %v1359
  %1684 = vmatprep.subr.bf16.mxu0 %v1372
  %1685 = vmatpush1.bf16.msra.mxu0 %v1371
  %1686 = vmatprep.subr.bf16.mxu0 %v1384
  %1687 = vmatpush1.bf16.msra.mxu0 %v1383
  %1688 = vmatprep.subr.bf16.mxu0 %v1396
  %1689 = vmatpush1.bf16.msra.mxu0 %v1395
  %1690 = vmatprep.subr.bf16.mxu0 %v1408
  %1691 = vmatpush1.bf16.msra.mxu0 %v1407
  %1692 = vmatprep.subr.bf16.mxu0 %v1420
  %1693 = vmatpush1.bf16.msra.mxu0 %v1419
  %1694 = vmatprep.mubr.bf16.mxu0 %v658
  %1695 = vmatmul.mubr.bf16.gmra.mrb[0].mxu0 %v657
  %v1696 = vpop.f32.mrb[0].mxu0
  %v1697 = vadd.f32 0.0, %v1696
  %v1698 = vpop.f32.mrb[0].mxu0
  %v1699 = vadd.f32 0.0, %v1698
  %v1700 = vpop.f32.mrb[0].mxu0
  %v1701 = vpop.f32.mrb[0].mxu0
  %1702 = vdwg.mxu0
  %1703 = vmatprep.subr.bf16.mxu0 %v1242
  %1704 = vmatpush1.bf16.msra.mxu0 %v1241
  %1705 = vmatprep.subr.bf16.mxu0 %v1254
  %1706 = vmatpush1.bf16.msra.mxu0 %v1253
  %1707 = vmatprep.subr.bf16.mxu0 %v1266
  %1708 = vmatpush1.bf16.msra.mxu0 %v1265
  %1709 = vmatprep.subr.bf16.mxu0 %v1278
  %1710 = vmatpush1.bf16.msra.mxu0 %v1277
  %1711 = vmatprep.subr.bf16.mxu0 %v1290
  %1712 = vmatpush1.bf16.msra.mxu0 %v1289
  %1713 = vmatprep.subr.bf16.mxu0 %v1302
  %1714 = vmatpush1.bf16.msra.mxu0 %v1301
  %1715 = vmatprep.subr.bf16.mxu0 %v1314
  %1716 = vmatpush1.bf16.msra.mxu0 %v1313
  %1717 = vmatprep.subr.bf16.mxu0 %v1326
  %1718 = vmatpush1.bf16.msra.mxu0 %v1325
  %1719 = vmatprep.subr.bf16.mxu0 %v1338
  %1720 = vmatpush1.bf16.msra.mxu0 %v1337
  %1721 = vmatprep.subr.bf16.mxu0 %v1350
  %1722 = vmatpush1.bf16.msra.mxu0 %v1349
  %1723 = vmatprep.subr.bf16.mxu0 %v1362
  %1724 = vmatpush1.bf16.msra.mxu0 %v1361
  %1725 = vmatprep.subr.bf16.mxu0 %v1374
  %1726 = vmatpush1.bf16.msra.mxu0 %v1373
  %1727 = vmatprep.subr.bf16.mxu0 %v1386
  %1728 = vmatpush1.bf16.msra.mxu0 %v1385
  %1729 = vmatprep.subr.bf16.mxu0 %v1398
  %1730 = vmatpush1.bf16.msra.mxu0 %v1397
  %1731 = vmatprep.subr.bf16.mxu0 %v1410
  %1732 = vmatpush1.bf16.msra.mxu0 %v1409
  %1733 = vmatprep.subr.bf16.mxu0 %v1422
  %1734 = vmatpush1.bf16.msra.mxu0 %v1421
  %1735 = vmatprep.mubr.bf16.mxu0 %v658
  %1736 = vmatmul.mubr.bf16.gmra.mrb[0].mxu0 %v657
  %v1737 = vpop.f32.mrb[0].mxu0
  %v1738 = vadd.f32 0.0, %v1737
  %v1739 = vpop.f32.mrb[0].mxu0
  %v1740 = vadd.f32 0.0, %v1739
  %v1741 = vpop.f32.mrb[0].mxu0
  %v1742 = vpop.f32.mrb[0].mxu0
  %1743 = vdwg.mxu0
  %1744 = vmatprep.subr.bf16.mxu0 %v1244
  %1745 = vmatpush1.bf16.msra.mxu0 %v1243
  %1746 = vmatprep.subr.bf16.mxu0 %v1256
  %1747 = vmatpush1.bf16.msra.mxu0 %v1255
  %1748 = vmatprep.subr.bf16.mxu0 %v1268
  %1749 = vmatpush1.bf16.msra.mxu0 %v1267
  %1750 = vmatprep.subr.bf16.mxu0 %v1280
  %1751 = vmatpush1.bf16.msra.mxu0 %v1279
  %1752 = vmatprep.subr.bf16.mxu0 %v1292
  %1753 = vmatpush1.bf16.msra.mxu0 %v1291
  %1754 = vmatprep.subr.bf16.mxu0 %v1304
  %1755 = vmatpush1.bf16.msra.mxu0 %v1303
  %1756 = vmatprep.subr.bf16.mxu0 %v1316
  %1757 = vmatpush1.bf16.msra.mxu0 %v1315
  %1758 = vmatprep.subr.bf16.mxu0 %v1328
  %1759 = vmatpush1.bf16.msra.mxu0 %v1327
  %1760 = vmatprep.subr.bf16.mxu0 %v1340
  %1761 = vmatpush1.bf16.msra.mxu0 %v1339
  %1762 = vmatprep.subr.bf16.mxu0 %v1352
  %1763 = vmatpush1.bf16.msra.mxu0 %v1351
  %1764 = vmatprep.subr.bf16.mxu0 %v1364
  %1765 = vmatpush1.bf16.msra.mxu0 %v1363
  %1766 = vmatprep.subr.bf16.mxu0 %v1376
  %1767 = vmatpush1.bf16.msra.mxu0 %v1375
  %1768 = vmatprep.subr.bf16.mxu0 %v1388
  %1769 = vmatpush1.bf16.msra.mxu0 %v1387
  %1770 = vmatprep.subr.bf16.mxu0 %v1400
  %1771 = vmatpush1.bf16.msra.mxu0 %v1399
  %1772 = vmatprep.subr.bf16.mxu0 %v1412
  %1773 = vmatpush1.bf16.msra.mxu0 %v1411
  %1774 = vmatprep.subr.bf16.mxu0 %v1424
  %1775 = vmatpush1.bf16.msra.mxu0 %v1423
  %1776 = vmatprep.mubr.bf16.mxu0 %v658
  %1777 = vmatmul.mubr.bf16.gmra.mrb[0].mxu0 %v657
  %v1778 = vpop.f32.mrb[0].mxu0
  %v1779 = vadd.f32 0.0, %v1778
  %v1780 = vpop.f32.mrb[0].mxu0
  %v1781 = vadd.f32 0.0, %v1780
  %v1782 = vpop.f32.mrb[0].mxu0
  %v1783 = vpop.f32.mrb[0].mxu0
  %1784 = vdwg.mxu0
  %1785 = vmatprep.subr.bf16.mxu0 %v1246
  %1786 = vmatpush1.bf16.msra.mxu0 %v1245
  %1787 = vmatprep.subr.bf16.mxu0 %v1258
  %1788 = vmatpush1.bf16.msra.mxu0 %v1257
  %1789 = vmatprep.subr.bf16.mxu0 %v1270
  %1790 = vmatpush1.bf16.msra.mxu0 %v1269
  %1791 = vmatprep.subr.bf16.mxu0 %v1282
  %1792 = vmatpush1.bf16.msra.mxu0 %v1281
  %1793 = vmatprep.subr.bf16.mxu0 %v1294
  %1794 = vmatpush1.bf16.msra.mxu0 %v1293
  %1795 = vmatprep.subr.bf16.mxu0 %v1306
  %1796 = vmatpush1.bf16.msra.mxu0 %v1305
  %1797 = vmatprep.subr.bf16.mxu0 %v1318
  %1798 = vmatpush1.bf16.msra.mxu0 %v1317
  %1799 = vmatprep.subr.bf16.mxu0 %v1330
  %1800 = vmatpush1.bf16.msra.mxu0 %v1329
  %1801 = vmatprep.subr.bf16.mxu0 %v1342
  %1802 = vmatpush1.bf16.msra.mxu0 %v1341
  %1803 = vmatprep.subr.bf16.mxu0 %v1354
  %1804 = vmatpush1.bf16.msra.mxu0 %v1353
  %1805 = vmatprep.subr.bf16.mxu0 %v1366
  %1806 = vmatpush1.bf16.msra.mxu0 %v1365
  %1807 = vmatprep.subr.bf16.mxu0 %v1378
  %1808 = vmatpush1.bf16.msra.mxu0 %v1377
  %1809 = vmatprep.subr.bf16.mxu0 %v1390
  %1810 = vmatpush1.bf16.msra.mxu0 %v1389
  %1811 = vmatprep.subr.bf16.mxu0 %v1402
  %1812 = vmatpush1.bf16.msra.mxu0 %v1401
  %1813 = vmatprep.subr.bf16.mxu0 %v1414
  %1814 = vmatpush1.bf16.msra.mxu0 %v1413
  %1815 = vmatprep.subr.bf16.mxu0 %v1426
  %1816 = vmatpush1.bf16.msra.mxu0 %v1425
  %1817 = vmatprep.mubr.bf16.mxu0 %v658
  %1818 = vmatmul.mubr.bf16.gmra.mrb[0].mxu0 %v657
  %v1819 = vpop.f32.mrb[0].mxu0
  %v1820 = vadd.f32 0.0, %v1819
  %v1821 = vpop.f32.mrb[0].mxu0
  %v1822 = vadd.f32 0.0, %v1821
  %v1823 = vpop.f32.mrb[0].mxu0
  %v1824 = vpop.f32.mrb[0].mxu0
  %1825 = vdwg.mxu0
  %1826 = vmatprep.subr.bf16.mxu0 %v1248
  %1827 = vmatpush1.bf16.msra.mxu0 %v1247
  %1828 = vmatprep.subr.bf16.mxu0 %v1260
  %1829 = vmatpush1.bf16.msra.mxu0 %v1259
  %1830 = vmatprep.subr.bf16.mxu0 %v1272
  %1831 = vmatpush1.bf16.msra.mxu0 %v1271
  %1832 = vmatprep.subr.bf16.mxu0 %v1284
  %1833 = vmatpush1.bf16.msra.mxu0 %v1283
  %1834 = vmatprep.subr.bf16.mxu0 %v1296
  %1835 = vmatpush1.bf16.msra.mxu0 %v1295
  %1836 = vmatprep.subr.bf16.mxu0 %v1308
  %1837 = vmatpush1.bf16.msra.mxu0 %v1307
  %1838 = vmatprep.subr.bf16.mxu0 %v1320
  %1839 = vmatpush1.bf16.msra.mxu0 %v1319
  %1840 = vmatprep.subr.bf16.mxu0 %v1332
  %1841 = vmatpush1.bf16.msra.mxu0 %v1331
  %1842 = vmatprep.subr.bf16.mxu0 %v1344
  %1843 = vmatpush1.bf16.msra.mxu0 %v1343
  %1844 = vmatprep.subr.bf16.mxu0 %v1356
  %1845 = vmatpush1.bf16.msra.mxu0 %v1355
  %1846 = vmatprep.subr.bf16.mxu0 %v1368
  %1847 = vmatpush1.bf16.msra.mxu0 %v1367
  %1848 = vmatprep.subr.bf16.mxu0 %v1380
  %1849 = vmatpush1.bf16.msra.mxu0 %v1379
  %1850 = vmatprep.subr.bf16.mxu0 %v1392
  %1851 = vmatpush1.bf16.msra.mxu0 %v1391
  %1852 = vmatprep.subr.bf16.mxu0 %v1404
  %1853 = vmatpush1.bf16.msra.mxu0 %v1403
  %1854 = vmatprep.subr.bf16.mxu0 %v1416
  %1855 = vmatpush1.bf16.msra.mxu0 %v1415
  %1856 = vmatprep.subr.bf16.mxu0 %v1428
  %1857 = vmatpush1.bf16.msra.mxu0 %v1427
  %1858 = vmatprep.mubr.bf16.mxu0 %v658
  %1859 = vmatmul.mubr.bf16.gmra.mrb[0].mxu0 %v657
  %v1860 = vpop.f32.mrb[0].mxu0
  %v1861 = vadd.f32 0.0, %v1860
  %v1862 = vpop.f32.mrb[0].mxu0
  %v1863 = vadd.f32 0.0, %v1862
  %v1864 = vpop.f32.mrb[0].mxu0
  %v1865 = vpop.f32.mrb[0].mxu0
  %1866 = vdwg.mxu0
  %v1867 = vadd.f32 %v449, %v1656
  %v1868 = vadd.f32 %v450, %v1658
  %v1869 = vadd.f32 %v451, %v1697
  %v1870 = vadd.f32 %v452, %v1699
  %v1871 = vadd.f32 %v453, %v1738
  %v1872 = vadd.f32 %v454, %v1740
  %v1873 = vadd.f32 %v455, %v1779
  %v1874 = vadd.f32 %v456, %v1781
  %v1875 = vadd.f32 %v457, %v1820
  %v1876 = vadd.f32 %v458, %v1822
  %v1877 = vadd.f32 %v459, %v1861
  %v1878 = vadd.f32 %v460, %v1863
  %v1879 = vld [vmem:[%s3] sm:$0xff]
  %v1880 = vld [vmem:[%s3 + $0x8] sm:$0xff]
  %v1881 = vld [vmem:[%s3 + $0x10] sm:$0xff]
  %v1882 = vld [vmem:[%s3 + $0x18] sm:$0xff]
  %v1883 = vld [vmem:[%s3 + $0x20] sm:$0xff]
  %v1884 = vld [vmem:[%s3 + $0x28] sm:$0xff]
  %v1885 = vld [vmem:[%s3 + $0x30] sm:$0xff]
  %v1886 = vld [vmem:[%s3 + $0x38] sm:$0xff]
  %v1887 = vld [vmem:[%s3 + $0x40] sm:$0xff]
  %v1888 = vld [vmem:[%s3 + $0x48] sm:$0xff]
  %v1889 = vld [vmem:[%s3 + $0x50] sm:$0xff]
  %v1890 = vld [vmem:[%s3 + $0x58] sm:$0xff]
  %v1891 = vld [vmem:[%s7] sm:$0xff]
  %v1892 = vld [vmem:[%s7 + $0x8] sm:$0xff]
  %v1893 = vld [vmem:[%s7 + $0x10] sm:$0xff]
  %v1894 = vld [vmem:[%s7 + $0x18] sm:$0xff]
  %v1895 = vld [vmem:[%s7 + $0x20] sm:$0xff]
  %v1896 = vld [vmem:[%s7 + $0x28] sm:$0xff]
  %v1897 = vld [vmem:[%s7 + $0x30] sm:$0xff]
  %v1898 = vld [vmem:[%s7 + $0x38] sm:$0xff]
  %v1899 = vld [vmem:[%s7 + $0x40] sm:$0xff]
  %v1900 = vld [vmem:[%s7 + $0x48] sm:$0xff]
  %v1901 = vld [vmem:[%s7 + $0x50] sm:$0xff]
  %v1902 = vld [vmem:[%s7 + $0x58] sm:$0xff]
  %vm1903 = vcmask 195584
  %v1905 = vsel %vm1903, %v1879, 0
  %v1908 = vsel %vm1903, %v1880, 0
  %v1911 = vsel %vm1903, %v1881, 0
  %v1914 = vsel %vm1903, %v1882, 0
  %v1917 = vsel %vm1903, %v1883, 0
  %v1920 = vsel %vm1903, %v1884, 0
  %v1923 = vsel %vm1903, %v1885, 0
  %v1926 = vsel %vm1903, %v1886, 0
  %v1929 = vsel %vm1903, %v1887, 0
  %v1932 = vsel %vm1903, %v1888, 0
  %v1935 = vsel %vm1903, %v1889, 0
  %v1938 = vsel %vm1903, %v1890, 0
  %1940 = vmatprep.subr.mxu0 %v1892
  %1941 = vmatpush1.msra.mxu0 %v1891
  %1942 = vmatprep.subr.mxu0 %v1896
  %1943 = vmatpush1.msra.mxu0 %v1895
  %1944 = vmatprep.subr.mxu0 %v1900
  %1945 = vmatpush1.msra.mxu0 %v1899
  %1946 = vmatprep.subr.mxu0 0.0
  %1947 = vmatpush1.msra.mxu0 0.0
  %1948 = vmatprep.subr.mxu0 0.0
  %1949 = vmatpush1.msra.mxu0 0.0
  %1950 = vmatprep.subr.mxu0 0.0
  %1951 = vmatpush1.msra.mxu0 0.0
  %1952 = vmatprep.subr.mxu0 0.0
  %1953 = vmatpush1.msra.mxu0 0.0
  %1954 = vmatprep.subr.mxu0 0.0
  %1955 = vmatpush1.msra.mxu0 0.0
  %1956 = vmatprep.subr.mxu0 0.0
  %1957 = vmatpush1.msra.mxu0 0.0
  %1958 = vmatprep.subr.mxu0 0.0
  %1959 = vmatpush1.msra.mxu0 0.0
  %1960 = vmatprep.subr.mxu0 0.0
  %1961 = vmatpush1.msra.mxu0 0.0
  %1962 = vmatprep.subr.mxu0 0.0
  %1963 = vmatpush1.msra.mxu0 0.0
  %1964 = vmatprep.subr.mxu0 0.0
  %1965 = vmatpush1.msra.mxu0 0.0
  %1966 = vmatprep.subr.mxu0 0.0
  %1967 = vmatpush1.msra.mxu0 0.0
  %1968 = vmatprep.subr.mxu0 0.0
  %1969 = vmatpush1.msra.mxu0 0.0
  %1970 = vmatprep.subr.mxu0 0.0
  %1971 = vmatpush1.msra.mxu0 0.0
  %1972 = vmatprep.subr.mxu0 0.0
  %1973 = vmatpush1.msra.mxu0 0.0
  %1974 = vmatprep.subr.mxu0 0.0
  %1975 = vmatpush1.msra.mxu0 0.0
  %1976 = vmatprep.subr.mxu0 0.0
  %1977 = vmatpush1.msra.mxu0 0.0
  %1978 = vmatprep.subr.mxu0 0.0
  %1979 = vmatpush1.msra.mxu0 0.0
  %1980 = vmatprep.subr.mxu0 0.0
  %1981 = vmatpush1.msra.mxu0 0.0
  %1982 = vmatprep.subr.mxu0 0.0
  %1983 = vmatpush1.msra.mxu0 0.0
  %1984 = vmatprep.subr.mxu0 0.0
  %1985 = vmatpush1.msra.mxu0 0.0
  %1986 = vmatprep.subr.mxu0 0.0
  %1987 = vmatpush1.msra.mxu0 0.0
  %1988 = vmatprep.subr.mxu0 0.0
  %1989 = vmatpush1.msra.mxu0 0.0
  %1990 = vmatprep.subr.mxu0 0.0
  %1991 = vmatpush1.msra.mxu0 0.0
  %1992 = vmatprep.subr.mxu0 0.0
  %1993 = vmatpush1.msra.mxu0 0.0
  %1994 = vmatprep.subr.mxu0 0.0
  %1995 = vmatpush1.msra.mxu0 0.0
  %1996 = vmatprep.subr.mxu0 0.0
  %1997 = vmatpush1.msra.mxu0 0.0
  %1998 = vmatprep.subr.mxu0 0.0
  %1999 = vmatpush1.msra.mxu0 0.0
  %2000 = vmatprep.subr.mxu0 0.0
  %2001 = vmatpush1.msra.mxu0 0.0
  %2002 = vmatprep.subr.mxu0 0.0
  %2003 = vmatpush1.msra.mxu0 0.0
  %2004 = vmatprep.mubr.f32.mxu0 0.0
  %2005 = vmatmul.mubr.f32.gmra.mrb[0].mxu0 %v1905
  %v2006 = vpop.f32.mrb[0].mxu0
  %v2007 = vadd.f32 0.0, %v2006
  %v2008 = vpop.f32.mrb[0].mxu0
  %v2009 = vadd.f32 0.0, %v2008
  %2010 = vmatprep.mubr.f32.mxu0 0.0
  %2011 = vmatmul.mubr.f32.gmra.mrb[0].mxu0 %v1908
  %v2012 = vpop.f32.mrb[0].mxu0
  %v2013 = vadd.f32 0.0, %v2012
  %v2014 = vpop.f32.mrb[0].mxu0
  %v2015 = vadd.f32 0.0, %v2014
  %2016 = vmatprep.mubr.f32.mxu0 0.0
  %2017 = vmatmul.mubr.f32.gmra.mrb[0].mxu0 %v1911
  %v2018 = vpop.f32.mrb[0].mxu0
  %v2019 = vadd.f32 0.0, %v2018
  %v2020 = vpop.f32.mrb[0].mxu0
  %v2021 = vadd.f32 0.0, %v2020
  %2022 = vmatprep.mubr.f32.mxu0 0.0
  %2023 = vmatmul.mubr.f32.gmra.mrb[0].mxu0 %v1914
  %v2024 = vpop.f32.mrb[0].mxu0
  %v2025 = vadd.f32 0.0, %v2024
  %v2026 = vpop.f32.mrb[0].mxu0
  %v2027 = vadd.f32 0.0, %v2026
  %2028 = vmatprep.mubr.f32.mxu0 0.0
  %2029 = vmatmul.mubr.f32.gmra.mrb[0].mxu0 %v1917
  %v2030 = vpop.f32.mrb[0].mxu0
  %v2031 = vadd.f32 0.0, %v2030
  %v2032 = vpop.f32.mrb[0].mxu0
  %v2033 = vadd.f32 0.0, %v2032
  %2034 = vmatprep.mubr.f32.mxu0 0.0
  %2035 = vmatmul.mubr.f32.gmra.mrb[0].mxu0 %v1920
  %v2036 = vpop.f32.mrb[0].mxu0
  %v2037 = vadd.f32 0.0, %v2036
  %v2038 = vpop.f32.mrb[0].mxu0
  %v2039 = vadd.f32 0.0, %v2038
  %2040 = vmatprep.mubr.f32.mxu0 0.0
  %2041 = vmatmul.mubr.f32.gmra.mrb[0].mxu0 %v1923
  %v2042 = vpop.f32.mrb[0].mxu0
  %v2043 = vadd.f32 0.0, %v2042
  %v2044 = vpop.f32.mrb[0].mxu0
  %v2045 = vadd.f32 0.0, %v2044
  %2046 = vmatprep.mubr.f32.mxu0 0.0
  %2047 = vmatmul.mubr.f32.gmra.mrb[0].mxu0 %v1926
  %v2048 = vpop.f32.mrb[0].mxu0
  %v2049 = vadd.f32 0.0, %v2048
  %v2050 = vpop.f32.mrb[0].mxu0
  %v2051 = vadd.f32 0.0, %v2050
  %2052 = vmatprep.mubr.f32.mxu0 0.0
  %2053 = vmatmul.mubr.f32.gmra.mrb[0].mxu0 %v1929
  %v2054 = vpop.f32.mrb[0].mxu0
  %v2055 = vadd.f32 0.0, %v2054
  %v2056 = vpop.f32.mrb[0].mxu0
  %v2057 = vadd.f32 0.0, %v2056
  %2058 = vmatprep.mubr.f32.mxu0 0.0
  %2059 = vmatmul.mubr.f32.gmra.mrb[0].mxu0 %v1932
  %v2060 = vpop.f32.mrb[0].mxu0
  %v2061 = vadd.f32 0.0, %v2060
  %v2062 = vpop.f32.mrb[0].mxu0
  %v2063 = vadd.f32 0.0, %v2062
  %2064 = vmatprep.mubr.f32.mxu0 0.0
  %2065 = vmatmul.mubr.f32.gmra.mrb[0].mxu0 %v1935
  %v2066 = vpop.f32.mrb[0].mxu0
  %v2067 = vadd.f32 0.0, %v2066
  %v2068 = vpop.f32.mrb[0].mxu0
  %v2069 = vadd.f32 0.0, %v2068
  %2070 = vmatprep.mubr.f32.mxu0 0.0
  %2071 = vmatmul.mubr.f32.gmra.mrb[0].mxu0 %v1938
  %v2072 = vpop.f32.mrb[0].mxu0
  %v2073 = vadd.f32 0.0, %v2072
  %v2074 = vpop.f32.mrb[0].mxu0
  %v2075 = vadd.f32 0.0, %v2074
  %2076 = vdwg.mxu0
  %2077 = vmatprep.subr.mxu0 %v1894
  %2078 = vmatpush1.msra.mxu0 %v1893
  %2079 = vmatprep.subr.mxu0 %v1898
  %2080 = vmatpush1.msra.mxu0 %v1897
  %2081 = vmatprep.subr.mxu0 %v1902
  %2082 = vmatpush1.msra.mxu0 %v1901
  %2083 = vmatprep.subr.mxu0 0.0
  %2084 = vmatpush1.msra.mxu0 0.0
  %2085 = vmatprep.subr.mxu0 0.0
  %2086 = vmatpush1.msra.mxu0 0.0
  %2087 = vmatprep.subr.mxu0 0.0
  %2088 = vmatpush1.msra.mxu0 0.0
  %2089 = vmatprep.subr.mxu0 0.0
  %2090 = vmatpush1.msra.mxu0 0.0
  %2091 = vmatprep.subr.mxu0 0.0
  %2092 = vmatpush1.msra.mxu0 0.0
  %2093 = vmatprep.subr.mxu0 0.0
  %2094 = vmatpush1.msra.mxu0 0.0
  %2095 = vmatprep.subr.mxu0 0.0
  %2096 = vmatpush1.msra.mxu0 0.0
  %2097 = vmatprep.subr.mxu0 0.0
  %2098 = vmatpush1.msra.mxu0 0.0
  %2099 = vmatprep.subr.mxu0 0.0
  %2100 = vmatpush1.msra.mxu0 0.0
  %2101 = vmatprep.subr.mxu0 0.0
  %2102 = vmatpush1.msra.mxu0 0.0
  %2103 = vmatprep.subr.mxu0 0.0
  %2104 = vmatpush1.msra.mxu0 0.0
  %2105 = vmatprep.subr.mxu0 0.0
  %2106 = vmatpush1.msra.mxu0 0.0
  %2107 = vmatprep.subr.mxu0 0.0
  %2108 = vmatpush1.msra.mxu0 0.0
  %2109 = vmatprep.subr.mxu0 0.0
  %2110 = vmatpush1.msra.mxu0 0.0
  %2111 = vmatprep.subr.mxu0 0.0
  %2112 = vmatpush1.msra.mxu0 0.0
  %2113 = vmatprep.subr.mxu0 0.0
  %2114 = vmatpush1.msra.mxu0 0.0
  %2115 = vmatprep.subr.mxu0 0.0
  %2116 = vmatpush1.msra.mxu0 0.0
  %2117 = vmatprep.subr.mxu0 0.0
  %2118 = vmatpush1.msra.mxu0 0.0
  %2119 = vmatprep.subr.mxu0 0.0
  %2120 = vmatpush1.msra.mxu0 0.0
  %2121 = vmatprep.subr.mxu0 0.0
  %2122 = vmatpush1.msra.mxu0 0.0
  %2123 = vmatprep.subr.mxu0 0.0
  %2124 = vmatpush1.msra.mxu0 0.0
  %2125 = vmatprep.subr.mxu0 0.0
  %2126 = vmatpush1.msra.mxu0 0.0
  %2127 = vmatprep.subr.mxu0 0.0
  %2128 = vmatpush1.msra.mxu0 0.0
  %2129 = vmatprep.subr.mxu0 0.0
  %2130 = vmatpush1.msra.mxu0 0.0
  %2131 = vmatprep.subr.mxu0 0.0
  %2132 = vmatpush1.msra.mxu0 0.0
  %2133 = vmatprep.subr.mxu0 0.0
  %2134 = vmatpush1.msra.mxu0 0.0
  %2135 = vmatprep.subr.mxu0 0.0
  %2136 = vmatpush1.msra.mxu0 0.0
  %2137 = vmatprep.subr.mxu0 0.0
  %2138 = vmatpush1.msra.mxu0 0.0
  %2139 = vmatprep.subr.mxu0 0.0
  %2140 = vmatpush1.msra.mxu0 0.0
  %2141 = vmatprep.mubr.f32.mxu0 0.0
  %2142 = vmatmul.mubr.f32.gmra.mrb[0].mxu0 %v1905
  %v2143 = vpop.f32.mrb[0].mxu0
  %v2144 = vadd.f32 0.0, %v2143
  %v2145 = vpop.f32.mrb[0].mxu0
  %v2146 = vadd.f32 0.0, %v2145
  %2147 = vmatprep.mubr.f32.mxu0 0.0
  %2148 = vmatmul.mubr.f32.gmra.mrb[0].mxu0 %v1908
  %v2149 = vpop.f32.mrb[0].mxu0
  %v2150 = vadd.f32 0.0, %v2149
  %v2151 = vpop.f32.mrb[0].mxu0
  %v2152 = vadd.f32 0.0, %v2151
  %2153 = vmatprep.mubr.f32.mxu0 0.0
  %2154 = vmatmul.mubr.f32.gmra.mrb[0].mxu0 %v1911
  %v2155 = vpop.f32.mrb[0].mxu0
  %v2156 = vadd.f32 0.0, %v2155
  %v2157 = vpop.f32.mrb[0].mxu0
  %v2158 = vadd.f32 0.0, %v2157
  %2159 = vmatprep.mubr.f32.mxu0 0.0
  %2160 = vmatmul.mubr.f32.gmra.mrb[0].mxu0 %v1914
  %v2161 = vpop.f32.mrb[0].mxu0
  %v2162 = vadd.f32 0.0, %v2161
  %v2163 = vpop.f32.mrb[0].mxu0
  %v2164 = vadd.f32 0.0, %v2163
  %2165 = vmatprep.mubr.f32.mxu0 0.0
  %2166 = vmatmul.mubr.f32.gmra.mrb[0].mxu0 %v1917
  %v2167 = vpop.f32.mrb[0].mxu0
  %v2168 = vadd.f32 0.0, %v2167
  %v2169 = vpop.f32.mrb[0].mxu0
  %v2170 = vadd.f32 0.0, %v2169
  %2171 = vmatprep.mubr.f32.mxu0 0.0
  %2172 = vmatmul.mubr.f32.gmra.mrb[0].mxu0 %v1920
  %v2173 = vpop.f32.mrb[0].mxu0
  %v2174 = vadd.f32 0.0, %v2173
  %v2175 = vpop.f32.mrb[0].mxu0
  %v2176 = vadd.f32 0.0, %v2175
  %2177 = vmatprep.mubr.f32.mxu0 0.0
  %2178 = vmatmul.mubr.f32.gmra.mrb[0].mxu0 %v1923
  %v2179 = vpop.f32.mrb[0].mxu0
  %v2180 = vadd.f32 0.0, %v2179
  %v2181 = vpop.f32.mrb[0].mxu0
  %v2182 = vadd.f32 0.0, %v2181
  %2183 = vmatprep.mubr.f32.mxu0 0.0
  %2184 = vmatmul.mubr.f32.gmra.mrb[0].mxu0 %v1926
  %v2185 = vpop.f32.mrb[0].mxu0
  %v2186 = vadd.f32 0.0, %v2185
  %v2187 = vpop.f32.mrb[0].mxu0
  %v2188 = vadd.f32 0.0, %v2187
  %2189 = vmatprep.mubr.f32.mxu0 0.0
  %2190 = vmatmul.mubr.f32.gmra.mrb[0].mxu0 %v1929
  %v2191 = vpop.f32.mrb[0].mxu0
  %v2192 = vadd.f32 0.0, %v2191
  %v2193 = vpop.f32.mrb[0].mxu0
  %v2194 = vadd.f32 0.0, %v2193
  %2195 = vmatprep.mubr.f32.mxu0 0.0
  %2196 = vmatmul.mubr.f32.gmra.mrb[0].mxu0 %v1932
  %v2197 = vpop.f32.mrb[0].mxu0
  %v2198 = vadd.f32 0.0, %v2197
  %v2199 = vpop.f32.mrb[0].mxu0
  %v2200 = vadd.f32 0.0, %v2199
  %2201 = vmatprep.mubr.f32.mxu0 0.0
  %2202 = vmatmul.mubr.f32.gmra.mrb[0].mxu0 %v1935
  %v2203 = vpop.f32.mrb[0].mxu0
  %v2204 = vadd.f32 0.0, %v2203
  %v2205 = vpop.f32.mrb[0].mxu0
  %v2206 = vadd.f32 0.0, %v2205
  %2207 = vmatprep.mubr.f32.mxu0 0.0
  %2208 = vmatmul.mubr.f32.gmra.mrb[0].mxu0 %v1938
  %v2209 = vpop.f32.mrb[0].mxu0
  %v2210 = vadd.f32 0.0, %v2209
  %v2211 = vpop.f32.mrb[0].mxu0
  %v2212 = vadd.f32 0.0, %v2211
  %2213 = vdwg.mxu0
  %v2214 = vmul.f32 %v2007, %v1867
  %v2215 = vmul.f32 %v2009, %v1868
  %v2216 = vmul.f32 %v2144, %v1869
  %v2217 = vmul.f32 %v2146, %v1870
  %v2218 = vmul.f32 %v2013, %v1871
  %v2219 = vmul.f32 %v2015, %v1872
  %v2220 = vmul.f32 %v2150, %v1873
  %v2221 = vmul.f32 %v2152, %v1874
  %v2222 = vadd.f32 %v2214, %v2218
  %v2223 = vadd.f32 %v2215, %v2219
  %v2224 = vadd.f32 %v2216, %v2220
  %v2225 = vadd.f32 %v2217, %v2221
  %v2226 = vmul.f32 %v2019, %v1875
  %v2227 = vmul.f32 %v2021, %v1876
  %v2228 = vmul.f32 %v2156, %v1877
  %v2229 = vmul.f32 %v2158, %v1878
  %v2230 = vadd.f32 %v2222, %v2226
  %v2231 = vadd.f32 %v2223, %v2227
  %v2232 = vadd.f32 %v2224, %v2228
  %v2233 = vadd.f32 %v2225, %v2229
  %v2234 = vadd.f32 %v2230, %v2061
  %v2235 = vadd.f32 %v2231, %v2063
  %v2236 = vadd.f32 %v2232, %v2198
  %v2237 = vadd.f32 %v2233, %v2200
  %v2238 = vmul.f32 %v2025, %v1867
  %v2239 = vmul.f32 %v2027, %v1868
  %v2240 = vmul.f32 %v2162, %v1869
  %v2241 = vmul.f32 %v2164, %v1870
  %v2242 = vmul.f32 %v2031, %v1871
  %v2243 = vmul.f32 %v2033, %v1872
  %v2244 = vmul.f32 %v2168, %v1873
  %v2245 = vmul.f32 %v2170, %v1874
  %v2246 = vadd.f32 %v2238, %v2242
  %v2247 = vadd.f32 %v2239, %v2243
  %v2248 = vadd.f32 %v2240, %v2244
  %v2249 = vadd.f32 %v2241, %v2245
  %v2250 = vmul.f32 %v2037, %v1875
  %v2251 = vmul.f32 %v2039, %v1876
  %v2252 = vmul.f32 %v2174, %v1877
  %v2253 = vmul.f32 %v2176, %v1878
  %v2254 = vadd.f32 %v2246, %v2250
  %v2255 = vadd.f32 %v2247, %v2251
  %v2256 = vadd.f32 %v2248, %v2252
  %v2257 = vadd.f32 %v2249, %v2253
  %v2258 = vadd.f32 %v2254, %v2067
  %v2259 = vadd.f32 %v2255, %v2069
  %v2260 = vadd.f32 %v2256, %v2204
  %v2261 = vadd.f32 %v2257, %v2206
  %v2262 = vmul.f32 %v2043, %v1867
  %v2263 = vmul.f32 %v2045, %v1868
  %v2264 = vmul.f32 %v2180, %v1869
  %v2265 = vmul.f32 %v2182, %v1870
  %v2266 = vmul.f32 %v2049, %v1871
  %v2267 = vmul.f32 %v2051, %v1872
  %v2268 = vmul.f32 %v2186, %v1873
  %v2269 = vmul.f32 %v2188, %v1874
  %v2270 = vadd.f32 %v2262, %v2266
  %v2271 = vadd.f32 %v2263, %v2267
  %v2272 = vadd.f32 %v2264, %v2268
  %v2273 = vadd.f32 %v2265, %v2269
  %v2274 = vmul.f32 %v2055, %v1875
  %v2275 = vmul.f32 %v2057, %v1876
  %v2276 = vmul.f32 %v2192, %v1877
  %v2277 = vmul.f32 %v2194, %v1878
  %v2278 = vadd.f32 %v2270, %v2274
  %v2279 = vadd.f32 %v2271, %v2275
  %v2280 = vadd.f32 %v2272, %v2276
  %v2281 = vadd.f32 %v2273, %v2277
  %v2282 = vadd.f32 %v2278, %v2073
  %v2283 = vadd.f32 %v2279, %v2075
  %v2284 = vadd.f32 %v2280, %v2210
  %v2285 = vadd.f32 %v2281, %v2212
  %2286 = vst [vmem:[%s9] sm:$0xff] %v2234
  %2287 = vst [vmem:[%s9 + $0x8] sm:$0xff] %v2235
  %2288 = vst [vmem:[%s9 + $0x10] sm:$0xff] %v2236
  %2289 = vst [vmem:[%s9 + $0x18] sm:$0xff] %v2237
  %2290 = vst [vmem:[%s9 + $0x20] sm:$0xff] %v2258
  %2291 = vst [vmem:[%s9 + $0x28] sm:$0xff] %v2259
  %2292 = vst [vmem:[%s9 + $0x30] sm:$0xff] %v2260
  %2293 = vst [vmem:[%s9 + $0x38] sm:$0xff] %v2261
  %2294 = vst [vmem:[%s9 + $0x40] sm:$0xff] %v2282
  %2295 = vst [vmem:[%s9 + $0x48] sm:$0xff] %v2283
  %2296 = vst [vmem:[%s9 + $0x50] sm:$0xff] %v2284
  %2297 = vst [vmem:[%s9 + $0x58] sm:$0xff] %v2285
  %v2298 = vld [vmem:[%s2] sm:$0xff]
  %2300 = vset.pattern.permute.xlu0 0
  %2301 = vperm.xlu0 %2300, %v2298
  %v2302 = vpop.permute.xlu0 %2301
  %v2304 = vmul.f32 %v2234, %v2302
  %v2305 = vmul.f32 %v2235, %v2302
  %v2306 = vmul.f32 %v2236, %v2302
  %v2307 = vmul.f32 %v2237, %v2302
  %2308 = vset.pattern.permute.xlu0 1
  %2309 = vperm.xlu0 %2308, %v2298
  %v2310 = vpop.permute.xlu0 %2309
  %v2312 = vadd.f32 %v2304, %v2310
  %v2313 = vadd.f32 %v2305, %v2310
  %v2314 = vadd.f32 %v2306, %v2310
  %v2315 = vadd.f32 %v2307, %v2310
  %2316 = vst [vmem:[%s10] sm:$0xff] %v2312
  %2317 = vst [vmem:[%s10 + $0x8] sm:$0xff] %v2313
  %2318 = vst [vmem:[%s10 + $0x10] sm:$0xff] %v2314
  %2319 = vst [vmem:[%s10 + $0x18] sm:$0xff] %v2315
  %v2320 = vmul.f32 %v2258, %v2302
  %v2321 = vmul.f32 %v2259, %v2302
  %v2322 = vmul.f32 %v2260, %v2302
  %v2323 = vmul.f32 %v2261, %v2302
  %2324 = vset.pattern.permute.xlu0 2
  %2325 = vperm.xlu0 %2324, %v2298
  %v2326 = vpop.permute.xlu0 %2325
  %v2328 = vadd.f32 %v2320, %v2326
  %v2329 = vadd.f32 %v2321, %v2326
  %v2330 = vadd.f32 %v2322, %v2326
  %v2331 = vadd.f32 %v2323, %v2326
  %2332 = vst [vmem:[%s10 + $0x20] sm:$0xff] %v2328
  %2333 = vst [vmem:[%s10 + $0x28] sm:$0xff] %v2329
  %2334 = vst [vmem:[%s10 + $0x30] sm:$0xff] %v2330
  %2335 = vst [vmem:[%s10 + $0x38] sm:$0xff] %v2331
  %2336 = vst [vmem:[%s10 + $0x40] sm:$0xff] %v2282
  %2337 = vst [vmem:[%s10 + $0x48] sm:$0xff] %v2283
  %2338 = vst [vmem:[%s10 + $0x50] sm:$0xff] %v2284
  %2339 = vst [vmem:[%s10 + $0x58] sm:$0xff] %v2285
  %v2340 = vld [vmem:[%s8] sm:$0xff]
  %v2341 = vld [vmem:[%s8 + $0x8] sm:$0xff]
  %v2342 = vld [vmem:[%s8 + $0x10] sm:$0xff]
  %v2343 = vld [vmem:[%s8 + $0x18] sm:$0xff]
  %v2344 = vld [vmem:[%s8 + $0x20] sm:$0xff]
  %v2345 = vld [vmem:[%s8 + $0x28] sm:$0xff]
  %v2346 = vld [vmem:[%s8 + $0x30] sm:$0xff]
  %v2347 = vld [vmem:[%s8 + $0x38] sm:$0xff]
  %v2348 = vld [vmem:[%s8 + $0x40] sm:$0xff]
  %v2349 = vld [vmem:[%s8 + $0x48] sm:$0xff]
  %v2350 = vld [vmem:[%s8 + $0x50] sm:$0xff]
  %v2351 = vld [vmem:[%s8 + $0x58] sm:$0xff]
  %v2352 = vld [vmem:[%s8 + $0x60] sm:$0xff]
  %v2353 = vld [vmem:[%s8 + $0x68] sm:$0xff]
  %v2354 = vld [vmem:[%s8 + $0x70] sm:$0xff]
  %v2355 = vld [vmem:[%s8 + $0x78] sm:$0xff]
  %v2356 = vld [vmem:[%s8 + $0x80] sm:$0xff]
  %v2357 = vld [vmem:[%s8 + $0x88] sm:$0xff]
  %v2358 = vld [vmem:[%s8 + $0x90] sm:$0xff]
  %v2359 = vld [vmem:[%s8 + $0x98] sm:$0xff]
  %v2360 = vld [vmem:[%s8 + $0xa0] sm:$0xff]
  %v2361 = vld [vmem:[%s8 + $0xa8] sm:$0xff]
  %v2362 = vld [vmem:[%s8 + $0xb0] sm:$0xff]
  %v2363 = vld [vmem:[%s8 + $0xb8] sm:$0xff]
  %v2364 = vld [vmem:[%s8 + $0xc0] sm:$0xff]
  %v2365 = vld [vmem:[%s8 + $0xc8] sm:$0xff]
  %v2366 = vld [vmem:[%s8 + $0xd0] sm:$0xff]
  %v2367 = vld [vmem:[%s8 + $0xd8] sm:$0xff]
  %v2368 = vld [vmem:[%s8 + $0xe0] sm:$0xff]
  %v2369 = vld [vmem:[%s8 + $0xe8] sm:$0xff]
  %v2370 = vld [vmem:[%s8 + $0xf0] sm:$0xff]
  %v2371 = vld [vmem:[%s8 + $0xf8] sm:$0xff]
  %v2372 = vld [vmem:[%s8 + $0x100] sm:$0xff]
  %v2373 = vld [vmem:[%s8 + $0x108] sm:$0xff]
  %v2374 = vld [vmem:[%s8 + $0x110] sm:$0xff]
  %v2375 = vld [vmem:[%s8 + $0x118] sm:$0xff]
  %v2376 = vld [vmem:[%s8 + $0x120] sm:$0xff]
  %v2377 = vld [vmem:[%s8 + $0x128] sm:$0xff]
  %v2378 = vld [vmem:[%s8 + $0x130] sm:$0xff]
  %v2379 = vld [vmem:[%s8 + $0x138] sm:$0xff]
  %v2380 = vld [vmem:[%s8 + $0x140] sm:$0xff]
  %v2381 = vld [vmem:[%s8 + $0x148] sm:$0xff]
  %v2382 = vld [vmem:[%s8 + $0x150] sm:$0xff]
  %v2383 = vld [vmem:[%s8 + $0x158] sm:$0xff]
  %v2384 = vld [vmem:[%s8 + $0x160] sm:$0xff]
  %v2385 = vld [vmem:[%s8 + $0x168] sm:$0xff]
  %v2386 = vld [vmem:[%s8 + $0x170] sm:$0xff]
  %v2387 = vld [vmem:[%s8 + $0x178] sm:$0xff]
  %v2388 = vld [vmem:[%s8 + $0x180] sm:$0xff]
  %v2389 = vld [vmem:[%s8 + $0x188] sm:$0xff]
  %v2390 = vld [vmem:[%s8 + $0x190] sm:$0xff]
  %v2391 = vld [vmem:[%s8 + $0x198] sm:$0xff]
  %v2392 = vld [vmem:[%s8 + $0x1a0] sm:$0xff]
  %v2393 = vld [vmem:[%s8 + $0x1a8] sm:$0xff]
  %v2394 = vld [vmem:[%s8 + $0x1b0] sm:$0xff]
  %v2395 = vld [vmem:[%s8 + $0x1b8] sm:$0xff]
  %v2396 = vld [vmem:[%s8 + $0x1c0] sm:$0xff]
  %v2397 = vld [vmem:[%s8 + $0x1c8] sm:$0xff]
  %v2398 = vld [vmem:[%s8 + $0x1d0] sm:$0xff]
  %v2399 = vld [vmem:[%s8 + $0x1d8] sm:$0xff]
  %v2400 = vld [vmem:[%s8 + $0x1e0] sm:$0xff]
  %v2401 = vld [vmem:[%s8 + $0x1e8] sm:$0xff]
  %v2402 = vld [vmem:[%s8 + $0x1f0] sm:$0xff]
  %v2403 = vld [vmem:[%s8 + $0x1f8] sm:$0xff]
  %2404 = vmatprep.subr.mxu0 0.0
  %2405 = vmatpush1.msra.mxu0 %v2340
  %2406 = vmatprep.subr.mxu0 0.0
  %2407 = vmatpush1.msra.mxu0 %v2341
  %2408 = vmatprep.subr.mxu0 0.0
  %2409 = vmatpush1.msra.mxu0 %v2342
  %2410 = vmatprep.subr.mxu0 0.0
  %2411 = vmatpush1.msra.mxu0 %v2343
  %2412 = vmatprep.subr.mxu0 0.0
  %2413 = vmatpush1.msra.mxu0 %v2344
  %2414 = vmatprep.subr.mxu0 0.0
  %2415 = vmatpush1.msra.mxu0 %v2345
  %2416 = vmatprep.subr.mxu0 0.0
  %2417 = vmatpush1.msra.mxu0 %v2346
  %2418 = vmatprep.subr.mxu0 0.0
  %2419 = vmatpush1.msra.mxu0 %v2347
  %2420 = vmatprep.subr.mxu0 0.0
  %2421 = vmatpush1.msra.mxu0 %v2348
  %2422 = vmatprep.subr.mxu0 0.0
  %2423 = vmatpush1.msra.mxu0 %v2349
  %2424 = vmatprep.subr.mxu0 0.0
  %2425 = vmatpush1.msra.mxu0 %v2350
  %2426 = vmatprep.subr.mxu0 0.0
  %2427 = vmatpush1.msra.mxu0 %v2351
  %2428 = vmatprep.subr.mxu0 0.0
  %2429 = vmatpush1.msra.mxu0 %v2352
  %2430 = vmatprep.subr.mxu0 0.0
  %2431 = vmatpush1.msra.mxu0 %v2353
  %2432 = vmatprep.subr.mxu0 0.0
  %2433 = vmatpush1.msra.mxu0 %v2354
  %2434 = vmatprep.subr.mxu0 0.0
  %2435 = vmatpush1.msra.mxu0 %v2355
  %2436 = vmatprep.subr.mxu0 0.0
  %2437 = vmatpush1.msra.mxu0 %v2356
  %2438 = vmatprep.subr.mxu0 0.0
  %2439 = vmatpush1.msra.mxu0 %v2357
  %2440 = vmatprep.subr.mxu0 0.0
  %2441 = vmatpush1.msra.mxu0 %v2358
  %2442 = vmatprep.subr.mxu0 0.0
  %2443 = vmatpush1.msra.mxu0 %v2359
  %2444 = vmatprep.subr.mxu0 0.0
  %2445 = vmatpush1.msra.mxu0 %v2360
  %2446 = vmatprep.subr.mxu0 0.0
  %2447 = vmatpush1.msra.mxu0 %v2361
  %2448 = vmatprep.subr.mxu0 0.0
  %2449 = vmatpush1.msra.mxu0 %v2362
  %2450 = vmatprep.subr.mxu0 0.0
  %2451 = vmatpush1.msra.mxu0 %v2363
  %2452 = vmatprep.subr.mxu0 0.0
  %2453 = vmatpush1.msra.mxu0 %v2364
  %2454 = vmatprep.subr.mxu0 0.0
  %2455 = vmatpush1.msra.mxu0 %v2365
  %2456 = vmatprep.subr.mxu0 0.0
  %2457 = vmatpush1.msra.mxu0 %v2366
  %2458 = vmatprep.subr.mxu0 0.0
  %2459 = vmatpush1.msra.mxu0 %v2367
  %2460 = vmatprep.subr.mxu0 0.0
  %2461 = vmatpush1.msra.mxu0 %v2368
  %2462 = vmatprep.subr.mxu0 0.0
  %2463 = vmatpush1.msra.mxu0 %v2369
  %2464 = vmatprep.subr.mxu0 0.0
  %2465 = vmatpush1.msra.mxu0 %v2370
  %2466 = vmatprep.subr.mxu0 0.0
  %2467 = vmatpush1.msra.mxu0 %v2371
  %2468 = vmatprep.mubr.f32.mxu0 %v2235
  %2469 = vmatmul.mubr.f32.gmra.mrb[0].mxu0 %v2234
  %v2470 = vpop.f32.mrb[0].mxu0
  %v2471 = vadd.f32 0.0, %v2470
  %v2472 = vpop.f32.mrb[0].mxu0
  %2473 = vdwg.mxu0
  %2474 = vmatprep.subr.mxu0 0.0
  %2475 = vmatpush1.msra.mxu0 %v2372
  %2476 = vmatprep.subr.mxu0 0.0
  %2477 = vmatpush1.msra.mxu0 %v2373
  %2478 = vmatprep.subr.mxu0 0.0
  %2479 = vmatpush1.msra.mxu0 %v2374
  %2480 = vmatprep.subr.mxu0 0.0
  %2481 = vmatpush1.msra.mxu0 %v2375
  %2482 = vmatprep.subr.mxu0 0.0
  %2483 = vmatpush1.msra.mxu0 %v2376
  %2484 = vmatprep.subr.mxu0 0.0
  %2485 = vmatpush1.msra.mxu0 %v2377
  %2486 = vmatprep.subr.mxu0 0.0
  %2487 = vmatpush1.msra.mxu0 %v2378
  %2488 = vmatprep.subr.mxu0 0.0
  %2489 = vmatpush1.msra.mxu0 %v2379
  %2490 = vmatprep.subr.mxu0 0.0
  %2491 = vmatpush1.msra.mxu0 %v2380
  %2492 = vmatprep.subr.mxu0 0.0
  %2493 = vmatpush1.msra.mxu0 %v2381
  %2494 = vmatprep.subr.mxu0 0.0
  %2495 = vmatpush1.msra.mxu0 %v2382
  %2496 = vmatprep.subr.mxu0 0.0
  %2497 = vmatpush1.msra.mxu0 %v2383
  %2498 = vmatprep.subr.mxu0 0.0
  %2499 = vmatpush1.msra.mxu0 %v2384
  %2500 = vmatprep.subr.mxu0 0.0
  %2501 = vmatpush1.msra.mxu0 %v2385
  %2502 = vmatprep.subr.mxu0 0.0
  %2503 = vmatpush1.msra.mxu0 %v2386
  %2504 = vmatprep.subr.mxu0 0.0
  %2505 = vmatpush1.msra.mxu0 %v2387
  %2506 = vmatprep.subr.mxu0 0.0
  %2507 = vmatpush1.msra.mxu0 %v2388
  %2508 = vmatprep.subr.mxu0 0.0
  %2509 = vmatpush1.msra.mxu0 %v2389
  %2510 = vmatprep.subr.mxu0 0.0
  %2511 = vmatpush1.msra.mxu0 %v2390
  %2512 = vmatprep.subr.mxu0 0.0
  %2513 = vmatpush1.msra.mxu0 %v2391
  %2514 = vmatprep.subr.mxu0 0.0
  %2515 = vmatpush1.msra.mxu0 %v2392
  %2516 = vmatprep.subr.mxu0 0.0
  %2517 = vmatpush1.msra.mxu0 %v2393
  %2518 = vmatprep.subr.mxu0 0.0
  %2519 = vmatpush1.msra.mxu0 %v2394
  %2520 = vmatprep.subr.mxu0 0.0
  %2521 = vmatpush1.msra.mxu0 %v2395
  %2522 = vmatprep.subr.mxu0 0.0
  %2523 = vmatpush1.msra.mxu0 %v2396
  %2524 = vmatprep.subr.mxu0 0.0
  %2525 = vmatpush1.msra.mxu0 %v2397
  %2526 = vmatprep.subr.mxu0 0.0
  %2527 = vmatpush1.msra.mxu0 %v2398
  %2528 = vmatprep.subr.mxu0 0.0
  %2529 = vmatpush1.msra.mxu0 %v2399
  %2530 = vmatprep.subr.mxu0 0.0
  %2531 = vmatpush1.msra.mxu0 %v2400
  %2532 = vmatprep.subr.mxu0 0.0
  %2533 = vmatpush1.msra.mxu0 %v2401
  %2534 = vmatprep.subr.mxu0 0.0
  %2535 = vmatpush1.msra.mxu0 %v2402
  %2536 = vmatprep.subr.mxu0 0.0
  %2537 = vmatpush1.msra.mxu0 %v2403
  %2538 = vmatprep.mubr.f32.mxu0 %v2237
  %2539 = vmatmul.mubr.f32.gmra.mrb[0].mxu0 %v2236
  %v2540 = vpop.f32.mrb[0].mxu0
  %v2541 = vadd.f32 %v2471, %v2540
  %v2542 = vpop.f32.mrb[0].mxu0
  %2543 = vdwg.mxu0
  %2544 = vmatprep.subr.mxu0 0.0
  %2545 = vmatpush1.msra.mxu0 %v2340
  %2546 = vmatprep.subr.mxu0 0.0
  %2547 = vmatpush1.msra.mxu0 %v2341
  %2548 = vmatprep.subr.mxu0 0.0
  %2549 = vmatpush1.msra.mxu0 %v2342
  %2550 = vmatprep.subr.mxu0 0.0
  %2551 = vmatpush1.msra.mxu0 %v2343
  %2552 = vmatprep.subr.mxu0 0.0
  %2553 = vmatpush1.msra.mxu0 %v2344
  %2554 = vmatprep.subr.mxu0 0.0
  %2555 = vmatpush1.msra.mxu0 %v2345
  %2556 = vmatprep.subr.mxu0 0.0
  %2557 = vmatpush1.msra.mxu0 %v2346
  %2558 = vmatprep.subr.mxu0 0.0
  %2559 = vmatpush1.msra.mxu0 %v2347
  %2560 = vmatprep.subr.mxu0 0.0
  %2561 = vmatpush1.msra.mxu0 %v2348
  %2562 = vmatprep.subr.mxu0 0.0
  %2563 = vmatpush1.msra.mxu0 %v2349
  %2564 = vmatprep.subr.mxu0 0.0
  %2565 = vmatpush1.msra.mxu0 %v2350
  %2566 = vmatprep.subr.mxu0 0.0
  %2567 = vmatpush1.msra.mxu0 %v2351
  %2568 = vmatprep.subr.mxu0 0.0
  %2569 = vmatpush1.msra.mxu0 %v2352
  %2570 = vmatprep.subr.mxu0 0.0
  %2571 = vmatpush1.msra.mxu0 %v2353
  %2572 = vmatprep.subr.mxu0 0.0
  %2573 = vmatpush1.msra.mxu0 %v2354
  %2574 = vmatprep.subr.mxu0 0.0
  %2575 = vmatpush1.msra.mxu0 %v2355
  %2576 = vmatprep.subr.mxu0 0.0
  %2577 = vmatpush1.msra.mxu0 %v2356
  %2578 = vmatprep.subr.mxu0 0.0
  %2579 = vmatpush1.msra.mxu0 %v2357
  %2580 = vmatprep.subr.mxu0 0.0
  %2581 = vmatpush1.msra.mxu0 %v2358
  %2582 = vmatprep.subr.mxu0 0.0
  %2583 = vmatpush1.msra.mxu0 %v2359
  %2584 = vmatprep.subr.mxu0 0.0
  %2585 = vmatpush1.msra.mxu0 %v2360
  %2586 = vmatprep.subr.mxu0 0.0
  %2587 = vmatpush1.msra.mxu0 %v2361
  %2588 = vmatprep.subr.mxu0 0.0
  %2589 = vmatpush1.msra.mxu0 %v2362
  %2590 = vmatprep.subr.mxu0 0.0
  %2591 = vmatpush1.msra.mxu0 %v2363
  %2592 = vmatprep.subr.mxu0 0.0
  %2593 = vmatpush1.msra.mxu0 %v2364
  %2594 = vmatprep.subr.mxu0 0.0
  %2595 = vmatpush1.msra.mxu0 %v2365
  %2596 = vmatprep.subr.mxu0 0.0
  %2597 = vmatpush1.msra.mxu0 %v2366
  %2598 = vmatprep.subr.mxu0 0.0
  %2599 = vmatpush1.msra.mxu0 %v2367
  %2600 = vmatprep.subr.mxu0 0.0
  %2601 = vmatpush1.msra.mxu0 %v2368
  %2602 = vmatprep.subr.mxu0 0.0
  %2603 = vmatpush1.msra.mxu0 %v2369
  %2604 = vmatprep.subr.mxu0 0.0
  %2605 = vmatpush1.msra.mxu0 %v2370
  %2606 = vmatprep.subr.mxu0 0.0
  %2607 = vmatpush1.msra.mxu0 %v2371
  %2608 = vmatprep.mubr.f32.mxu0 %v2259
  %2609 = vmatmul.mubr.f32.gmra.mrb[0].mxu0 %v2258
  %v2610 = vpop.f32.mrb[0].mxu0
  %v2611 = vadd.f32 0.0, %v2610
  %v2612 = vpop.f32.mrb[0].mxu0
  %2613 = vdwg.mxu0
  %2614 = vmatprep.subr.mxu0 0.0
  %2615 = vmatpush1.msra.mxu0 %v2372
  %2616 = vmatprep.subr.mxu0 0.0
  %2617 = vmatpush1.msra.mxu0 %v2373
  %2618 = vmatprep.subr.mxu0 0.0
  %2619 = vmatpush1.msra.mxu0 %v2374
  %2620 = vmatprep.subr.mxu0 0.0
  %2621 = vmatpush1.msra.mxu0 %v2375
  %2622 = vmatprep.subr.mxu0 0.0
  %2623 = vmatpush1.msra.mxu0 %v2376
  %2624 = vmatprep.subr.mxu0 0.0
  %2625 = vmatpush1.msra.mxu0 %v2377
  %2626 = vmatprep.subr.mxu0 0.0
  %2627 = vmatpush1.msra.mxu0 %v2378
  %2628 = vmatprep.subr.mxu0 0.0
  %2629 = vmatpush1.msra.mxu0 %v2379
  %2630 = vmatprep.subr.mxu0 0.0
  %2631 = vmatpush1.msra.mxu0 %v2380
  %2632 = vmatprep.subr.mxu0 0.0
  %2633 = vmatpush1.msra.mxu0 %v2381
  %2634 = vmatprep.subr.mxu0 0.0
  %2635 = vmatpush1.msra.mxu0 %v2382
  %2636 = vmatprep.subr.mxu0 0.0
  %2637 = vmatpush1.msra.mxu0 %v2383
  %2638 = vmatprep.subr.mxu0 0.0
  %2639 = vmatpush1.msra.mxu0 %v2384
  %2640 = vmatprep.subr.mxu0 0.0
  %2641 = vmatpush1.msra.mxu0 %v2385
  %2642 = vmatprep.subr.mxu0 0.0
  %2643 = vmatpush1.msra.mxu0 %v2386
  %2644 = vmatprep.subr.mxu0 0.0
  %2645 = vmatpush1.msra.mxu0 %v2387
  %2646 = vmatprep.subr.mxu0 0.0
  %2647 = vmatpush1.msra.mxu0 %v2388
  %2648 = vmatprep.subr.mxu0 0.0
  %2649 = vmatpush1.msra.mxu0 %v2389
  %2650 = vmatprep.subr.mxu0 0.0
  %2651 = vmatpush1.msra.mxu0 %v2390
  %2652 = vmatprep.subr.mxu0 0.0
  %2653 = vmatpush1.msra.mxu0 %v2391
  %2654 = vmatprep.subr.mxu0 0.0
  %2655 = vmatpush1.msra.mxu0 %v2392
  %2656 = vmatprep.subr.mxu0 0.0
  %2657 = vmatpush1.msra.mxu0 %v2393
  %2658 = vmatprep.subr.mxu0 0.0
  %2659 = vmatpush1.msra.mxu0 %v2394
  %2660 = vmatprep.subr.mxu0 0.0
  %2661 = vmatpush1.msra.mxu0 %v2395
  %2662 = vmatprep.subr.mxu0 0.0
  %2663 = vmatpush1.msra.mxu0 %v2396
  %2664 = vmatprep.subr.mxu0 0.0
  %2665 = vmatpush1.msra.mxu0 %v2397
  %2666 = vmatprep.subr.mxu0 0.0
  %2667 = vmatpush1.msra.mxu0 %v2398
  %2668 = vmatprep.subr.mxu0 0.0
  %2669 = vmatpush1.msra.mxu0 %v2399
  %2670 = vmatprep.subr.mxu0 0.0
  %2671 = vmatpush1.msra.mxu0 %v2400
  %2672 = vmatprep.subr.mxu0 0.0
  %2673 = vmatpush1.msra.mxu0 %v2401
  %2674 = vmatprep.subr.mxu0 0.0
  %2675 = vmatpush1.msra.mxu0 %v2402
  %2676 = vmatprep.subr.mxu0 0.0
  %2677 = vmatpush1.msra.mxu0 %v2403
  %2678 = vmatprep.mubr.f32.mxu0 %v2261
  %2679 = vmatmul.mubr.f32.gmra.mrb[0].mxu0 %v2260
  %v2680 = vpop.f32.mrb[0].mxu0
  %v2681 = vadd.f32 %v2611, %v2680
  %v2682 = vpop.f32.mrb[0].mxu0
  %2683 = vdwg.mxu0
  %2684 = vmatprep.subr.mxu0 0.0
  %2685 = vmatpush1.msra.mxu0 %v2340
  %2686 = vmatprep.subr.mxu0 0.0
  %2687 = vmatpush1.msra.mxu0 %v2341
  %2688 = vmatprep.subr.mxu0 0.0
  %2689 = vmatpush1.msra.mxu0 %v2342
  %2690 = vmatprep.subr.mxu0 0.0
  %2691 = vmatpush1.msra.mxu0 %v2343
  %2692 = vmatprep.subr.mxu0 0.0
  %2693 = vmatpush1.msra.mxu0 %v2344
  %2694 = vmatprep.subr.mxu0 0.0
  %2695 = vmatpush1.msra.mxu0 %v2345
  %2696 = vmatprep.subr.mxu0 0.0
  %2697 = vmatpush1.msra.mxu0 %v2346
  %2698 = vmatprep.subr.mxu0 0.0
  %2699 = vmatpush1.msra.mxu0 %v2347
  %2700 = vmatprep.subr.mxu0 0.0
  %2701 = vmatpush1.msra.mxu0 %v2348
  %2702 = vmatprep.subr.mxu0 0.0
  %2703 = vmatpush1.msra.mxu0 %v2349
  %2704 = vmatprep.subr.mxu0 0.0
  %2705 = vmatpush1.msra.mxu0 %v2350
  %2706 = vmatprep.subr.mxu0 0.0
  %2707 = vmatpush1.msra.mxu0 %v2351
  %2708 = vmatprep.subr.mxu0 0.0
  %2709 = vmatpush1.msra.mxu0 %v2352
  %2710 = vmatprep.subr.mxu0 0.0
  %2711 = vmatpush1.msra.mxu0 %v2353
  %2712 = vmatprep.subr.mxu0 0.0
  %2713 = vmatpush1.msra.mxu0 %v2354
  %2714 = vmatprep.subr.mxu0 0.0
  %2715 = vmatpush1.msra.mxu0 %v2355
  %2716 = vmatprep.subr.mxu0 0.0
  %2717 = vmatpush1.msra.mxu0 %v2356
  %2718 = vmatprep.subr.mxu0 0.0
  %2719 = vmatpush1.msra.mxu0 %v2357
  %2720 = vmatprep.subr.mxu0 0.0
  %2721 = vmatpush1.msra.mxu0 %v2358
  %2722 = vmatprep.subr.mxu0 0.0
  %2723 = vmatpush1.msra.mxu0 %v2359
  %2724 = vmatprep.subr.mxu0 0.0
  %2725 = vmatpush1.msra.mxu0 %v2360
  %2726 = vmatprep.subr.mxu0 0.0
  %2727 = vmatpush1.msra.mxu0 %v2361
  %2728 = vmatprep.subr.mxu0 0.0
  %2729 = vmatpush1.msra.mxu0 %v2362
  %2730 = vmatprep.subr.mxu0 0.0
  %2731 = vmatpush1.msra.mxu0 %v2363
  %2732 = vmatprep.subr.mxu0 0.0
  %2733 = vmatpush1.msra.mxu0 %v2364
  %2734 = vmatprep.subr.mxu0 0.0
  %2735 = vmatpush1.msra.mxu0 %v2365
  %2736 = vmatprep.subr.mxu0 0.0
  %2737 = vmatpush1.msra.mxu0 %v2366
  %2738 = vmatprep.subr.mxu0 0.0
  %2739 = vmatpush1.msra.mxu0 %v2367
  %2740 = vmatprep.subr.mxu0 0.0
  %2741 = vmatpush1.msra.mxu0 %v2368
  %2742 = vmatprep.subr.mxu0 0.0
  %2743 = vmatpush1.msra.mxu0 %v2369
  %2744 = vmatprep.subr.mxu0 0.0
  %2745 = vmatpush1.msra.mxu0 %v2370
  %2746 = vmatprep.subr.mxu0 0.0
  %2747 = vmatpush1.msra.mxu0 %v2371
  %2748 = vmatprep.mubr.f32.mxu0 %v2283
  %2749 = vmatmul.mubr.f32.gmra.mrb[0].mxu0 %v2282
  %v2750 = vpop.f32.mrb[0].mxu0
  %v2751 = vadd.f32 0.0, %v2750
  %v2752 = vpop.f32.mrb[0].mxu0
  %2753 = vdwg.mxu0
  %2754 = vmatprep.subr.mxu0 0.0
  %2755 = vmatpush1.msra.mxu0 %v2372
  %2756 = vmatprep.subr.mxu0 0.0
  %2757 = vmatpush1.msra.mxu0 %v2373
  %2758 = vmatprep.subr.mxu0 0.0
  %2759 = vmatpush1.msra.mxu0 %v2374
  %2760 = vmatprep.subr.mxu0 0.0
  %2761 = vmatpush1.msra.mxu0 %v2375
  %2762 = vmatprep.subr.mxu0 0.0
  %2763 = vmatpush1.msra.mxu0 %v2376
  %2764 = vmatprep.subr.mxu0 0.0
  %2765 = vmatpush1.msra.mxu0 %v2377
  %2766 = vmatprep.subr.mxu0 0.0
  %2767 = vmatpush1.msra.mxu0 %v2378
  %2768 = vmatprep.subr.mxu0 0.0
  %2769 = vmatpush1.msra.mxu0 %v2379
  %2770 = vmatprep.subr.mxu0 0.0
  %2771 = vmatpush1.msra.mxu0 %v2380
  %2772 = vmatprep.subr.mxu0 0.0
  %2773 = vmatpush1.msra.mxu0 %v2381
  %2774 = vmatprep.subr.mxu0 0.0
  %2775 = vmatpush1.msra.mxu0 %v2382
  %2776 = vmatprep.subr.mxu0 0.0
  %2777 = vmatpush1.msra.mxu0 %v2383
  %2778 = vmatprep.subr.mxu0 0.0
  %2779 = vmatpush1.msra.mxu0 %v2384
  %2780 = vmatprep.subr.mxu0 0.0
  %2781 = vmatpush1.msra.mxu0 %v2385
  %2782 = vmatprep.subr.mxu0 0.0
  %2783 = vmatpush1.msra.mxu0 %v2386
  %2784 = vmatprep.subr.mxu0 0.0
  %2785 = vmatpush1.msra.mxu0 %v2387
  %2786 = vmatprep.subr.mxu0 0.0
  %2787 = vmatpush1.msra.mxu0 %v2388
  %2788 = vmatprep.subr.mxu0 0.0
  %2789 = vmatpush1.msra.mxu0 %v2389
  %2790 = vmatprep.subr.mxu0 0.0
  %2791 = vmatpush1.msra.mxu0 %v2390
  %2792 = vmatprep.subr.mxu0 0.0
  %2793 = vmatpush1.msra.mxu0 %v2391
  %2794 = vmatprep.subr.mxu0 0.0
  %2795 = vmatpush1.msra.mxu0 %v2392
  %2796 = vmatprep.subr.mxu0 0.0
  %2797 = vmatpush1.msra.mxu0 %v2393
  %2798 = vmatprep.subr.mxu0 0.0
  %2799 = vmatpush1.msra.mxu0 %v2394
  %2800 = vmatprep.subr.mxu0 0.0
  %2801 = vmatpush1.msra.mxu0 %v2395
  %2802 = vmatprep.subr.mxu0 0.0
  %2803 = vmatpush1.msra.mxu0 %v2396
  %2804 = vmatprep.subr.mxu0 0.0
  %2805 = vmatpush1.msra.mxu0 %v2397
  %2806 = vmatprep.subr.mxu0 0.0
  %2807 = vmatpush1.msra.mxu0 %v2398
  %2808 = vmatprep.subr.mxu0 0.0
  %2809 = vmatpush1.msra.mxu0 %v2399
  %2810 = vmatprep.subr.mxu0 0.0
  %2811 = vmatpush1.msra.mxu0 %v2400
  %2812 = vmatprep.subr.mxu0 0.0
  %2813 = vmatpush1.msra.mxu0 %v2401
  %2814 = vmatprep.subr.mxu0 0.0
  %2815 = vmatpush1.msra.mxu0 %v2402
  %2816 = vmatprep.subr.mxu0 0.0
  %2817 = vmatpush1.msra.mxu0 %v2403
  %2818 = vmatprep.mubr.f32.mxu0 %v2285
  %2819 = vmatmul.mubr.f32.gmra.mrb[0].mxu0 %v2284
  %v2820 = vpop.f32.mrb[0].mxu0
  %v2821 = vadd.f32 %v2751, %v2820
  %v2822 = vpop.f32.mrb[0].mxu0
  %2823 = vdwg.mxu0
  %2824 = vst [vmem:[%s11] sm:$0xff] %v2541
  %2825 = vst [vmem:[%s11 + $0x8] sm:$0xff] %v2681
  %2826 = vst [vmem:[%s11 + $0x10] sm:$0xff] %v2821
  %v2827 = vmul.f32 %v2541, %v2302
  %v2828 = vadd.f32 %v2827, %v2310
  %2829 = vst [vmem:[%s12] sm:$0xff] %v2828
  %v2830 = vmul.f32 %v2681, %v2302
  %v2831 = vadd.f32 %v2830, %v2326
  %2832 = vst [vmem:[%s12 + $0x8] sm:$0xff] %v2831
  // Predicated region
  $region38: #{smpl_wrapper_forward.1} parent=0 // pred_check
    _
  $region39: #{smpl_wrapper_forward.1} parent=0 // pred_check_branch
    %2834 = sbr.rel (0) target = $region41
  $region40: #{smpl_wrapper_forward.1} parent=0 // pred_region
    _
  $region41: #{smpl_wrapper_forward.1} parent=0 // pred_fallthru
    _
  // Predicated region
  $region42: #{smpl_wrapper_forward.1} parent=0 // pred_check
    _
  $region43: #{smpl_wrapper_forward.1} parent=0 // pred_check_branch
    %2836 = sbr.rel (0) target = $region45
  $region44: #{smpl_wrapper_forward.1} parent=0 // pred_region
    _
  $region45: #{smpl_wrapper_forward.1} parent=0 // pred_fallthru
    _
  // Predicated region
  $region46: #{smpl_wrapper_forward.1} parent=0 // pred_check
    _
  $region47: #{smpl_wrapper_forward.1} parent=0 // pred_check_branch
    %2838 = sbr.rel (0) target = $region49
  $region48: #{smpl_wrapper_forward.1} parent=0 // pred_region
    _
  $region49: #{smpl_wrapper_forward.1} parent=0 // pred_fallthru
    _
  // Predicated region
  $region50: #{smpl_wrapper_forward.1} parent=0 // pred_check
    _
  $region51: #{smpl_wrapper_forward.1} parent=0 // pred_check_branch
    %2840 = sbr.rel (0) target = $region53
  $region52: #{smpl_wrapper_forward.1} parent=0 // pred_region
    _
  $region53: #{smpl_wrapper_forward.1} parent=0 // pred_fallthru
    _
  // Predicated region
  $region54: #{smpl_wrapper_forward.1} parent=0 // pred_check
    _
  $region55: #{smpl_wrapper_forward.1} parent=0 // pred_check_branch
    %2842 = sbr.rel (0) target = $region57
  $region56: #{smpl_wrapper_forward.1} parent=0 // pred_region
    _
  $region57: #{smpl_wrapper_forward.1} parent=0 // pred_fallthru
    _
  // Predicated region
  $region58: #{smpl_wrapper_forward.1} parent=0 // pred_check
    _
  $region59: #{smpl_wrapper_forward.1} parent=0 // pred_check_branch
    %2844 = sbr.rel (0) target = $region61
  $region60: #{smpl_wrapper_forward.1} parent=0 // pred_region
    _
  $region61: #{smpl_wrapper_forward.1} parent=0 // pred_fallthru
    _
  // Predicated region
  $region62: #{smpl_wrapper_forward.1} parent=0 // pred_check
    _
  $region63: #{smpl_wrapper_forward.1} parent=0 // pred_check_branch
    %2846 = sbr.rel (0) target = $region65
  $region64: #{smpl_wrapper_forward.1} parent=0 // pred_region
    _
  $region65: #{smpl_wrapper_forward.1} parent=0 // pred_fallthru
    _
  // Predicated region
  $region66: #{smpl_wrapper_forward.1} parent=0 // pred_check
    _
  $region67: #{smpl_wrapper_forward.1} parent=0 // pred_check_branch
    %2848 = sbr.rel (0) target = $region69
  $region68: #{smpl_wrapper_forward.1} parent=0 // pred_region
    _
  $region69: #{smpl_wrapper_forward.1} parent=0 // pred_fallthru
    _

</llo_original>
